<compile_context>
chip_gen: v5e
topology: v5e:2x2
jax: 0.10.0
libtpu: 0.0.40
codegen_flags: <defaults>
</compile_context>

<pallas_src>
import functools

import jax
import jax.numpy as jnp
from jax.experimental import pallas as pl
from jax.experimental.pallas import tpu as pltpu


def _conv_relu_kernel(x_ref, w_ref, conv_ref, act_ref, *, kh, kw):
    # x_ref:    (N, H, W)        VMEM, f32 (single input channel squeezed in wrapper)
    # w_ref:    (OC*KH*KW,)      SMEM, f32, flattened OIHW order
    # conv_ref: (N, OC, OH, OW)  VMEM
    # act_ref:  (N, OC, OH, OW)  VMEM
    n, oc_n, oh, ow = conv_ref.shape

    # Whole (tiny) batch into vregs once.  At N=2 this plus 4 accumulators is
    # ~20 vregs; do NOT scale this pattern past ~8-16 images (vreg spill) --
    # tile N with a grid axis instead (see TODO at top of file).
    x = x_ref[...]

    accs = [jnp.zeros((n, oh, ow), jnp.float32) for _ in range(oc_n)]

    # j outer: one lane-offset slice per kernel column (kw total, XLU work),
    # i middle: sublane-only slices (cheap),
    # oc inner: reuse the shifted window for every output channel; the weight
    # tap is a scalar read from SMEM down the otherwise-idle scalar slot.
    for j in range(kw):
        x_cols = x[:, :, j:j + ow]                # lane-offset slice (4 total)
        for i in range(kh):
            window = x_cols[:, i:i + oh, :]       # sublane-only slice
            for oc in range(oc_n):
                w_tap = w_ref[oc * kh * kw + i * kw + j]
                accs[oc] = accs[oc] + w_tap * window

    for oc in range(oc_n):
        acc = accs[oc]
        conv_ref[:, oc, :, :] = acc.astype(conv_ref.dtype)
        act_ref[:, oc, :, :] = jnp.maximum(acc, 0.0).astype(act_ref.dtype)


def net_forward(x, weight):
    """x: (N, 1, H, W), weight: (OC, 1, KH, KW) -> (conv_x, relu(conv_x)).

    Stride-1 VALID convolution with no bias, matching nn.Conv2d(1, 4, (kh, kw),
    bias=False).
    """
    n, cin, h, w = x.shape
    oc, wcin, kh, kw = weight.shape
    assert cin == 1 and wcin == 1, "Net uses Conv2d(1, 4, ...) with 1 input channel"
    assert kh <= h and kw <= w, "kernel larger than input (VALID conv, stride 1)"
    oh, ow = h - kh + 1, w - kw + 1

    out_dtype = x.dtype
    x3 = x.reshape(n, h, w).astype(jnp.float32)          # drop singleton channel
    w_flat = weight.reshape(-1).astype(jnp.float32)      # f32 scalars for SMEM reads

    kernel = functools.partial(_conv_relu_kernel, kh=kh, kw=kw)

    conv_x, activated_x = pl.pallas_call(
        kernel,
        out_shape=(
            jax.ShapeDtypeStruct((n, oc, oh, ow), jnp.float32),
            jax.ShapeDtypeStruct((n, oc, oh, ow), jnp.float32),
        ),
        in_specs=[
            pl.BlockSpec(memory_space=pltpu.MemorySpace.VMEM),   # full image batch
            pl.BlockSpec(memory_space=pltpu.MemorySpace.SMEM),   # 64 weight scalars
        ],
        out_specs=(
            pl.BlockSpec(memory_space=pltpu.MemorySpace.VMEM),
            pl.BlockSpec(memory_space=pltpu.MemorySpace.VMEM),
        ),
    )(x3, w_flat)

    return conv_x.astype(out_dtype), activated_x.astype(out_dtype)


if __name__ == "__main__":
    key = jax.random.PRNGKey(0)
    k_x, k_w = jax.random.split(key)

    # Small shapes consistent with the module: batch=2, 1 input channel,
    # 16x16 spatial, 4 output channels, 4x4 kernel.
    N, H, W = 2, 16, 16
    OC, KH, KW = 4, 4, 4

    x = jax.random.normal(k_x, (N, 1, H, W), dtype=jnp.float32)
    weight = jax.random.normal(k_w, (OC, 1, KH, KW), dtype=jnp.float32) * 0.1

    conv_x, activated_x = net_forward(x, weight)
    jax.block_until_ready((conv_x, activated_x))

    # Reference check with XLA's conv (NCHW, OIHW, VALID padding, stride 1).
    ref_conv = jax.lax.conv_general_dilated(
        x, weight, window_strides=(1, 1), padding="VALID",
        dimension_numbers=("NCHW", "OIHW", "NCHW"))
    ref_act = jnp.maximum(ref_conv, 0.0)
    assert jnp.allclose(conv_x, ref_conv, atol=1e-5, rtol=1e-5)
    assert jnp.allclose(activated_x, ref_act, atol=1e-5, rtol=1e-5)

    print("KERNEL_OK")
</pallas_src>

<mosaic_0001>
module attributes {stable_mosaic.version = 11 : i64} {
  func.func @_conv_relu_kernel(%arg0: memref<2x16x16xf32, #tpu.memory_space<vmem>>, %arg1: memref<64xf32, #tpu.memory_space<smem>>, %arg2: memref<2x4x13x13xf32, #tpu.memory_space<vmem>>, %arg3: memref<2x4x13x13xf32, #tpu.memory_space<vmem>>) attributes {dimension_semantics = [], scalar_prefetch = 0 : i64, scratch_operands = 0 : i64, tpu.core_type = #tpu.core_type<tc>} {
    %c0 = arith.constant 0 : index
    %c0_0 = arith.constant 0 : index
    %c0_1 = arith.constant 0 : index
    %0 = vector.load %arg0[%c0, %c0_0, %c0_1] : memref<2x16x16xf32, #tpu.memory_space<vmem>>, vector<2x16x16xf32>
    %cst = arith.constant 0.000000e+00 : f32
    %1 = vector.broadcast %cst : f32 to vector<2x13x13xf32>
    %cst_2 = arith.constant 0.000000e+00 : f32
    %2 = vector.broadcast %cst_2 : f32 to vector<2x13x13xf32>
    %cst_3 = arith.constant 0.000000e+00 : f32
    %3 = vector.broadcast %cst_3 : f32 to vector<2x13x13xf32>
    %cst_4 = arith.constant 0.000000e+00 : f32
    %4 = vector.broadcast %cst_4 : f32 to vector<2x13x13xf32>
    %5 = vector.extract_strided_slice %0 {offsets = [0, 0, 0], sizes = [2, 16, 13], strides = [1, 1, 1]} : vector<2x16x16xf32> to vector<2x16x13xf32>
    %6 = vector.extract_strided_slice %5 {offsets = [0, 0, 0], sizes = [2, 13, 13], strides = [1, 1, 1]} : vector<2x16x13xf32> to vector<2x13x13xf32>
    %c0_5 = arith.constant 0 : index
    %7 = memref.load %arg1[%c0_5] : memref<64xf32, #tpu.memory_space<smem>>
    %8 = vector.broadcast %7 : f32 to vector<2x13x13xf32>
    %9 = arith.mulf %8, %6 : vector<2x13x13xf32>
    %10 = arith.addf %1, %9 : vector<2x13x13xf32>
    %c16 = arith.constant 16 : index
    %11 = memref.load %arg1[%c16] : memref<64xf32, #tpu.memory_space<smem>>
    %12 = vector.broadcast %11 : f32 to vector<2x13x13xf32>
    %13 = arith.mulf %12, %6 : vector<2x13x13xf32>
    %14 = arith.addf %2, %13 : vector<2x13x13xf32>
    %c32 = arith.constant 32 : index
    %15 = memref.load %arg1[%c32] : memref<64xf32, #tpu.memory_space<smem>>
    %16 = vector.broadcast %15 : f32 to vector<2x13x13xf32>
    %17 = arith.mulf %16, %6 : vector<2x13x13xf32>
    %18 = arith.addf %3, %17 : vector<2x13x13xf32>
    %c48 = arith.constant 48 : index
    %19 = memref.load %arg1[%c48] : memref<64xf32, #tpu.memory_space<smem>>
    %20 = vector.broadcast %19 : f32 to vector<2x13x13xf32>
    %21 = arith.mulf %20, %6 : vector<2x13x13xf32>
    %22 = arith.addf %4, %21 : vector<2x13x13xf32>
    %23 = vector.extract_strided_slice %5 {offsets = [0, 1, 0], sizes = [2, 13, 13], strides = [1, 1, 1]} : vector<2x16x13xf32> to vector<2x13x13xf32>
    %c4 = arith.constant 4 : index
    %24 = memref.load %arg1[%c4] : memref<64xf32, #tpu.memory_space<smem>>
    %25 = vector.broadcast %24 : f32 to vector<2x13x13xf32>
    %26 = arith.mulf %25, %23 : vector<2x13x13xf32>
    %27 = arith.addf %10, %26 : vector<2x13x13xf32>
    %c20 = arith.constant 20 : index
    %28 = memref.load %arg1[%c20] : memref<64xf32, #tpu.memory_space<smem>>
    %29 = vector.broadcast %28 : f32 to vector<2x13x13xf32>
    %30 = arith.mulf %29, %23 : vector<2x13x13xf32>
    %31 = arith.addf %14, %30 : vector<2x13x13xf32>
    %c36 = arith.constant 36 : index
    %32 = memref.load %arg1[%c36] : memref<64xf32, #tpu.memory_space<smem>>
    %33 = vector.broadcast %32 : f32 to vector<2x13x13xf32>
    %34 = arith.mulf %33, %23 : vector<2x13x13xf32>
    %35 = arith.addf %18, %34 : vector<2x13x13xf32>
    %c52 = arith.constant 52 : index
    %36 = memref.load %arg1[%c52] : memref<64xf32, #tpu.memory_space<smem>>
    %37 = vector.broadcast %36 : f32 to vector<2x13x13xf32>
    %38 = arith.mulf %37, %23 : vector<2x13x13xf32>
    %39 = arith.addf %22, %38 : vector<2x13x13xf32>
    %40 = vector.extract_strided_slice %5 {offsets = [0, 2, 0], sizes = [2, 13, 13], strides = [1, 1, 1]} : vector<2x16x13xf32> to vector<2x13x13xf32>
    %c8 = arith.constant 8 : index
    %41 = memref.load %arg1[%c8] : memref<64xf32, #tpu.memory_space<smem>>
    %42 = vector.broadcast %41 : f32 to vector<2x13x13xf32>
    %43 = arith.mulf %42, %40 : vector<2x13x13xf32>
    %44 = arith.addf %27, %43 : vector<2x13x13xf32>
    %c24 = arith.constant 24 : index
    %45 = memref.load %arg1[%c24] : memref<64xf32, #tpu.memory_space<smem>>
    %46 = vector.broadcast %45 : f32 to vector<2x13x13xf32>
    %47 = arith.mulf %46, %40 : vector<2x13x13xf32>
    %48 = arith.addf %31, %47 : vector<2x13x13xf32>
    %c40 = arith.constant 40 : index
    %49 = memref.load %arg1[%c40] : memref<64xf32, #tpu.memory_space<smem>>
    %50 = vector.broadcast %49 : f32 to vector<2x13x13xf32>
    %51 = arith.mulf %50, %40 : vector<2x13x13xf32>
    %52 = arith.addf %35, %51 : vector<2x13x13xf32>
    %c56 = arith.constant 56 : index
    %53 = memref.load %arg1[%c56] : memref<64xf32, #tpu.memory_space<smem>>
    %54 = vector.broadcast %53 : f32 to vector<2x13x13xf32>
    %55 = arith.mulf %54, %40 : vector<2x13x13xf32>
    %56 = arith.addf %39, %55 : vector<2x13x13xf32>
    %57 = vector.extract_strided_slice %5 {offsets = [0, 3, 0], sizes = [2, 13, 13], strides = [1, 1, 1]} : vector<2x16x13xf32> to vector<2x13x13xf32>
    %c12 = arith.constant 12 : index
    %58 = memref.load %arg1[%c12] : memref<64xf32, #tpu.memory_space<smem>>
    %59 = vector.broadcast %58 : f32 to vector<2x13x13xf32>
    %60 = arith.mulf %59, %57 : vector<2x13x13xf32>
    %61 = arith.addf %44, %60 : vector<2x13x13xf32>
    %c28 = arith.constant 28 : index
    %62 = memref.load %arg1[%c28] : memref<64xf32, #tpu.memory_space<smem>>
    %63 = vector.broadcast %62 : f32 to vector<2x13x13xf32>
    %64 = arith.mulf %63, %57 : vector<2x13x13xf32>
    %65 = arith.addf %48, %64 : vector<2x13x13xf32>
    %c44 = arith.constant 44 : index
    %66 = memref.load %arg1[%c44] : memref<64xf32, #tpu.memory_space<smem>>
    %67 = vector.broadcast %66 : f32 to vector<2x13x13xf32>
    %68 = arith.mulf %67, %57 : vector<2x13x13xf32>
    %69 = arith.addf %52, %68 : vector<2x13x13xf32>
    %c60 = arith.constant 60 : index
    %70 = memref.load %arg1[%c60] : memref<64xf32, #tpu.memory_space<smem>>
    %71 = vector.broadcast %70 : f32 to vector<2x13x13xf32>
    %72 = arith.mulf %71, %57 : vector<2x13x13xf32>
    %73 = arith.addf %56, %72 : vector<2x13x13xf32>
    %74 = vector.extract_strided_slice %0 {offsets = [0, 0, 1], sizes = [2, 16, 13], strides = [1, 1, 1]} : vector<2x16x16xf32> to vector<2x16x13xf32>
    %75 = vector.extract_strided_slice %74 {offsets = [0, 0, 0], sizes = [2, 13, 13], strides = [1, 1, 1]} : vector<2x16x13xf32> to vector<2x13x13xf32>
    %c1 = arith.constant 1 : index
    %76 = memref.load %arg1[%c1] : memref<64xf32, #tpu.memory_space<smem>>
    %77 = vector.broadcast %76 : f32 to vector<2x13x13xf32>
    %78 = arith.mulf %77, %75 : vector<2x13x13xf32>
    %79 = arith.addf %61, %78 : vector<2x13x13xf32>
    %c17 = arith.constant 17 : index
    %80 = memref.load %arg1[%c17] : memref<64xf32, #tpu.memory_space<smem>>
    %81 = vector.broadcast %80 : f32 to vector<2x13x13xf32>
    %82 = arith.mulf %81, %75 : vector<2x13x13xf32>
    %83 = arith.addf %65, %82 : vector<2x13x13xf32>
    %c33 = arith.constant 33 : index
    %84 = memref.load %arg1[%c33] : memref<64xf32, #tpu.memory_space<smem>>
    %85 = vector.broadcast %84 : f32 to vector<2x13x13xf32>
    %86 = arith.mulf %85, %75 : vector<2x13x13xf32>
    %87 = arith.addf %69, %86 : vector<2x13x13xf32>
    %c49 = arith.constant 49 : index
    %88 = memref.load %arg1[%c49] : memref<64xf32, #tpu.memory_space<smem>>
    %89 = vector.broadcast %88 : f32 to vector<2x13x13xf32>
    %90 = arith.mulf %89, %75 : vector<2x13x13xf32>
    %91 = arith.addf %73, %90 : vector<2x13x13xf32>
    %92 = vector.extract_strided_slice %74 {offsets = [0, 1, 0], sizes = [2, 13, 13], strides = [1, 1, 1]} : vector<2x16x13xf32> to vector<2x13x13xf32>
    %c5 = arith.constant 5 : index
    %93 = memref.load %arg1[%c5] : memref<64xf32, #tpu.memory_space<smem>>
    %94 = vector.broadcast %93 : f32 to vector<2x13x13xf32>
    %95 = arith.mulf %94, %92 : vector<2x13x13xf32>
    %96 = arith.addf %79, %95 : vector<2x13x13xf32>
    %c21 = arith.constant 21 : index
    %97 = memref.load %arg1[%c21] : memref<64xf32, #tpu.memory_space<smem>>
    %98 = vector.broadcast %97 : f32 to vector<2x13x13xf32>
    %99 = arith.mulf %98, %92 : vector<2x13x13xf32>
    %100 = arith.addf %83, %99 : vector<2x13x13xf32>
    %c37 = arith.constant 37 : index
    %101 = memref.load %arg1[%c37] : memref<64xf32, #tpu.memory_space<smem>>
    %102 = vector.broadcast %101 : f32 to vector<2x13x13xf32>
    %103 = arith.mulf %102, %92 : vector<2x13x13xf32>
    %104 = arith.addf %87, %103 : vector<2x13x13xf32>
    %c53 = arith.constant 53 : index
    %105 = memref.load %arg1[%c53] : memref<64xf32, #tpu.memory_space<smem>>
    %106 = vector.broadcast %105 : f32 to vector<2x13x13xf32>
    %107 = arith.mulf %106, %92 : vector<2x13x13xf32>
    %108 = arith.addf %91, %107 : vector<2x13x13xf32>
    %109 = vector.extract_strided_slice %74 {offsets = [0, 2, 0], sizes = [2, 13, 13], strides = [1, 1, 1]} : vector<2x16x13xf32> to vector<2x13x13xf32>
    %c9 = arith.constant 9 : index
    %110 = memref.load %arg1[%c9] : memref<64xf32, #tpu.memory_space<smem>>
    %111 = vector.broadcast %110 : f32 to vector<2x13x13xf32>
    %112 = arith.mulf %111, %109 : vector<2x13x13xf32>
    %113 = arith.addf %96, %112 : vector<2x13x13xf32>
    %c25 = arith.constant 25 : index
    %114 = memref.load %arg1[%c25] : memref<64xf32, #tpu.memory_space<smem>>
    %115 = vector.broadcast %114 : f32 to vector<2x13x13xf32>
    %116 = arith.mulf %115, %109 : vector<2x13x13xf32>
    %117 = arith.addf %100, %116 : vector<2x13x13xf32>
    %c41 = arith.constant 41 : index
    %118 = memref.load %arg1[%c41] : memref<64xf32, #tpu.memory_space<smem>>
    %119 = vector.broadcast %118 : f32 to vector<2x13x13xf32>
    %120 = arith.mulf %119, %109 : vector<2x13x13xf32>
    %121 = arith.addf %104, %120 : vector<2x13x13xf32>
    %c57 = arith.constant 57 : index
    %122 = memref.load %arg1[%c57] : memref<64xf32, #tpu.memory_space<smem>>
    %123 = vector.broadcast %122 : f32 to vector<2x13x13xf32>
    %124 = arith.mulf %123, %109 : vector<2x13x13xf32>
    %125 = arith.addf %108, %124 : vector<2x13x13xf32>
    %126 = vector.extract_strided_slice %74 {offsets = [0, 3, 0], sizes = [2, 13, 13], strides = [1, 1, 1]} : vector<2x16x13xf32> to vector<2x13x13xf32>
    %c13 = arith.constant 13 : index
    %127 = memref.load %arg1[%c13] : memref<64xf32, #tpu.memory_space<smem>>
    %128 = vector.broadcast %127 : f32 to vector<2x13x13xf32>
    %129 = arith.mulf %128, %126 : vector<2x13x13xf32>
    %130 = arith.addf %113, %129 : vector<2x13x13xf32>
    %c29 = arith.constant 29 : index
    %131 = memref.load %arg1[%c29] : memref<64xf32, #tpu.memory_space<smem>>
    %132 = vector.broadcast %131 : f32 to vector<2x13x13xf32>
    %133 = arith.mulf %132, %126 : vector<2x13x13xf32>
    %134 = arith.addf %117, %133 : vector<2x13x13xf32>
    %c45 = arith.constant 45 : index
    %135 = memref.load %arg1[%c45] : memref<64xf32, #tpu.memory_space<smem>>
    %136 = vector.broadcast %135 : f32 to vector<2x13x13xf32>
    %137 = arith.mulf %136, %126 : vector<2x13x13xf32>
    %138 = arith.addf %121, %137 : vector<2x13x13xf32>
    %c61 = arith.constant 61 : index
    %139 = memref.load %arg1[%c61] : memref<64xf32, #tpu.memory_space<smem>>
    %140 = vector.broadcast %139 : f32 to vector<2x13x13xf32>
    %141 = arith.mulf %140, %126 : vector<2x13x13xf32>
    %142 = arith.addf %125, %141 : vector<2x13x13xf32>
    %143 = vector.extract_strided_slice %0 {offsets = [0, 0, 2], sizes = [2, 16, 13], strides = [1, 1, 1]} : vector<2x16x16xf32> to vector<2x16x13xf32>
    %144 = vector.extract_strided_slice %143 {offsets = [0, 0, 0], sizes = [2, 13, 13], strides = [1, 1, 1]} : vector<2x16x13xf32> to vector<2x13x13xf32>
    %c2 = arith.constant 2 : index
    %145 = memref.load %arg1[%c2] : memref<64xf32, #tpu.memory_space<smem>>
    %146 = vector.broadcast %145 : f32 to vector<2x13x13xf32>
    %147 = arith.mulf %146, %144 : vector<2x13x13xf32>
    %148 = arith.addf %130, %147 : vector<2x13x13xf32>
    %c18 = arith.constant 18 : index
    %149 = memref.load %arg1[%c18] : memref<64xf32, #tpu.memory_space<smem>>
    %150 = vector.broadcast %149 : f32 to vector<2x13x13xf32>
    %151 = arith.mulf %150, %144 : vector<2x13x13xf32>
    %152 = arith.addf %134, %151 : vector<2x13x13xf32>
    %c34 = arith.constant 34 : index
    %153 = memref.load %arg1[%c34] : memref<64xf32, #tpu.memory_space<smem>>
    %154 = vector.broadcast %153 : f32 to vector<2x13x13xf32>
    %155 = arith.mulf %154, %144 : vector<2x13x13xf32>
    %156 = arith.addf %138, %155 : vector<2x13x13xf32>
    %c50 = arith.constant 50 : index
    %157 = memref.load %arg1[%c50] : memref<64xf32, #tpu.memory_space<smem>>
    %158 = vector.broadcast %157 : f32 to vector<2x13x13xf32>
    %159 = arith.mulf %158, %144 : vector<2x13x13xf32>
    %160 = arith.addf %142, %159 : vector<2x13x13xf32>
    %161 = vector.extract_strided_slice %143 {offsets = [0, 1, 0], sizes = [2, 13, 13], strides = [1, 1, 1]} : vector<2x16x13xf32> to vector<2x13x13xf32>
    %c6 = arith.constant 6 : index
    %162 = memref.load %arg1[%c6] : memref<64xf32, #tpu.memory_space<smem>>
    %163 = vector.broadcast %162 : f32 to vector<2x13x13xf32>
    %164 = arith.mulf %163, %161 : vector<2x13x13xf32>
    %165 = arith.addf %148, %164 : vector<2x13x13xf32>
    %c22 = arith.constant 22 : index
    %166 = memref.load %arg1[%c22] : memref<64xf32, #tpu.memory_space<smem>>
    %167 = vector.broadcast %166 : f32 to vector<2x13x13xf32>
    %168 = arith.mulf %167, %161 : vector<2x13x13xf32>
    %169 = arith.addf %152, %168 : vector<2x13x13xf32>
    %c38 = arith.constant 38 : index
    %170 = memref.load %arg1[%c38] : memref<64xf32, #tpu.memory_space<smem>>
    %171 = vector.broadcast %170 : f32 to vector<2x13x13xf32>
    %172 = arith.mulf %171, %161 : vector<2x13x13xf32>
    %173 = arith.addf %156, %172 : vector<2x13x13xf32>
    %c54 = arith.constant 54 : index
    %174 = memref.load %arg1[%c54] : memref<64xf32, #tpu.memory_space<smem>>
    %175 = vector.broadcast %174 : f32 to vector<2x13x13xf32>
    %176 = arith.mulf %175, %161 : vector<2x13x13xf32>
    %177 = arith.addf %160, %176 : vector<2x13x13xf32>
    %178 = vector.extract_strided_slice %143 {offsets = [0, 2, 0], sizes = [2, 13, 13], strides = [1, 1, 1]} : vector<2x16x13xf32> to vector<2x13x13xf32>
    %c10 = arith.constant 10 : index
    %179 = memref.load %arg1[%c10] : memref<64xf32, #tpu.memory_space<smem>>
    %180 = vector.broadcast %179 : f32 to vector<2x13x13xf32>
    %181 = arith.mulf %180, %178 : vector<2x13x13xf32>
    %182 = arith.addf %165, %181 : vector<2x13x13xf32>
    %c26 = arith.constant 26 : index
    %183 = memref.load %arg1[%c26] : memref<64xf32, #tpu.memory_space<smem>>
    %184 = vector.broadcast %183 : f32 to vector<2x13x13xf32>
    %185 = arith.mulf %184, %178 : vector<2x13x13xf32>
    %186 = arith.addf %169, %185 : vector<2x13x13xf32>
    %c42 = arith.constant 42 : index
    %187 = memref.load %arg1[%c42] : memref<64xf32, #tpu.memory_space<smem>>
    %188 = vector.broadcast %187 : f32 to vector<2x13x13xf32>
    %189 = arith.mulf %188, %178 : vector<2x13x13xf32>
    %190 = arith.addf %173, %189 : vector<2x13x13xf32>
    %c58 = arith.constant 58 : index
    %191 = memref.load %arg1[%c58] : memref<64xf32, #tpu.memory_space<smem>>
    %192 = vector.broadcast %191 : f32 to vector<2x13x13xf32>
    %193 = arith.mulf %192, %178 : vector<2x13x13xf32>
    %194 = arith.addf %177, %193 : vector<2x13x13xf32>
    %195 = vector.extract_strided_slice %143 {offsets = [0, 3, 0], sizes = [2, 13, 13], strides = [1, 1, 1]} : vector<2x16x13xf32> to vector<2x13x13xf32>
    %c14 = arith.constant 14 : index
    %196 = memref.load %arg1[%c14] : memref<64xf32, #tpu.memory_space<smem>>
    %197 = vector.broadcast %196 : f32 to vector<2x13x13xf32>
    %198 = arith.mulf %197, %195 : vector<2x13x13xf32>
    %199 = arith.addf %182, %198 : vector<2x13x13xf32>
    %c30 = arith.constant 30 : index
    %200 = memref.load %arg1[%c30] : memref<64xf32, #tpu.memory_space<smem>>
    %201 = vector.broadcast %200 : f32 to vector<2x13x13xf32>
    %202 = arith.mulf %201, %195 : vector<2x13x13xf32>
    %203 = arith.addf %186, %202 : vector<2x13x13xf32>
    %c46 = arith.constant 46 : index
    %204 = memref.load %arg1[%c46] : memref<64xf32, #tpu.memory_space<smem>>
    %205 = vector.broadcast %204 : f32 to vector<2x13x13xf32>
    %206 = arith.mulf %205, %195 : vector<2x13x13xf32>
    %207 = arith.addf %190, %206 : vector<2x13x13xf32>
    %c62 = arith.constant 62 : index
    %208 = memref.load %arg1[%c62] : memref<64xf32, #tpu.memory_space<smem>>
    %209 = vector.broadcast %208 : f32 to vector<2x13x13xf32>
    %210 = arith.mulf %209, %195 : vector<2x13x13xf32>
    %211 = arith.addf %194, %210 : vector<2x13x13xf32>
    %212 = vector.extract_strided_slice %0 {offsets = [0, 0, 3], sizes = [2, 16, 13], strides = [1, 1, 1]} : vector<2x16x16xf32> to vector<2x16x13xf32>
    %213 = vector.extract_strided_slice %212 {offsets = [0, 0, 0], sizes = [2, 13, 13], strides = [1, 1, 1]} : vector<2x16x13xf32> to vector<2x13x13xf32>
    %c3 = arith.constant 3 : index
    %214 = memref.load %arg1[%c3] : memref<64xf32, #tpu.memory_space<smem>>
    %215 = vector.broadcast %214 : f32 to vector<2x13x13xf32>
    %216 = arith.mulf %215, %213 : vector<2x13x13xf32>
    %217 = arith.addf %199, %216 : vector<2x13x13xf32>
    %c19 = arith.constant 19 : index
    %218 = memref.load %arg1[%c19] : memref<64xf32, #tpu.memory_space<smem>>
    %219 = vector.broadcast %218 : f32 to vector<2x13x13xf32>
    %220 = arith.mulf %219, %213 : vector<2x13x13xf32>
    %221 = arith.addf %203, %220 : vector<2x13x13xf32>
    %c35 = arith.constant 35 : index
    %222 = memref.load %arg1[%c35] : memref<64xf32, #tpu.memory_space<smem>>
    %223 = vector.broadcast %222 : f32 to vector<2x13x13xf32>
    %224 = arith.mulf %223, %213 : vector<2x13x13xf32>
    %225 = arith.addf %207, %224 : vector<2x13x13xf32>
    %c51 = arith.constant 51 : index
    %226 = memref.load %arg1[%c51] : memref<64xf32, #tpu.memory_space<smem>>
    %227 = vector.broadcast %226 : f32 to vector<2x13x13xf32>
    %228 = arith.mulf %227, %213 : vector<2x13x13xf32>
    %229 = arith.addf %211, %228 : vector<2x13x13xf32>
    %230 = vector.extract_strided_slice %212 {offsets = [0, 1, 0], sizes = [2, 13, 13], strides = [1, 1, 1]} : vector<2x16x13xf32> to vector<2x13x13xf32>
    %c7 = arith.constant 7 : index
    %231 = memref.load %arg1[%c7] : memref<64xf32, #tpu.memory_space<smem>>
    %232 = vector.broadcast %231 : f32 to vector<2x13x13xf32>
    %233 = arith.mulf %232, %230 : vector<2x13x13xf32>
    %234 = arith.addf %217, %233 : vector<2x13x13xf32>
    %c23 = arith.constant 23 : index
    %235 = memref.load %arg1[%c23] : memref<64xf32, #tpu.memory_space<smem>>
    %236 = vector.broadcast %235 : f32 to vector<2x13x13xf32>
    %237 = arith.mulf %236, %230 : vector<2x13x13xf32>
    %238 = arith.addf %221, %237 : vector<2x13x13xf32>
    %c39 = arith.constant 39 : index
    %239 = memref.load %arg1[%c39] : memref<64xf32, #tpu.memory_space<smem>>
    %240 = vector.broadcast %239 : f32 to vector<2x13x13xf32>
    %241 = arith.mulf %240, %230 : vector<2x13x13xf32>
    %242 = arith.addf %225, %241 : vector<2x13x13xf32>
    %c55 = arith.constant 55 : index
    %243 = memref.load %arg1[%c55] : memref<64xf32, #tpu.memory_space<smem>>
    %244 = vector.broadcast %243 : f32 to vector<2x13x13xf32>
    %245 = arith.mulf %244, %230 : vector<2x13x13xf32>
    %246 = arith.addf %229, %245 : vector<2x13x13xf32>
    %247 = vector.extract_strided_slice %212 {offsets = [0, 2, 0], sizes = [2, 13, 13], strides = [1, 1, 1]} : vector<2x16x13xf32> to vector<2x13x13xf32>
    %c11 = arith.constant 11 : index
    %248 = memref.load %arg1[%c11] : memref<64xf32, #tpu.memory_space<smem>>
    %249 = vector.broadcast %248 : f32 to vector<2x13x13xf32>
    %250 = arith.mulf %249, %247 : vector<2x13x13xf32>
    %251 = arith.addf %234, %250 : vector<2x13x13xf32>
    %c27 = arith.constant 27 : index
    %252 = memref.load %arg1[%c27] : memref<64xf32, #tpu.memory_space<smem>>
    %253 = vector.broadcast %252 : f32 to vector<2x13x13xf32>
    %254 = arith.mulf %253, %247 : vector<2x13x13xf32>
    %255 = arith.addf %238, %254 : vector<2x13x13xf32>
    %c43 = arith.constant 43 : index
    %256 = memref.load %arg1[%c43] : memref<64xf32, #tpu.memory_space<smem>>
    %257 = vector.broadcast %256 : f32 to vector<2x13x13xf32>
    %258 = arith.mulf %257, %247 : vector<2x13x13xf32>
    %259 = arith.addf %242, %258 : vector<2x13x13xf32>
    %c59 = arith.constant 59 : index
    %260 = memref.load %arg1[%c59] : memref<64xf32, #tpu.memory_space<smem>>
    %261 = vector.broadcast %260 : f32 to vector<2x13x13xf32>
    %262 = arith.mulf %261, %247 : vector<2x13x13xf32>
    %263 = arith.addf %246, %262 : vector<2x13x13xf32>
    %264 = vector.extract_strided_slice %212 {offsets = [0, 3, 0], sizes = [2, 13, 13], strides = [1, 1, 1]} : vector<2x16x13xf32> to vector<2x13x13xf32>
    %c15 = arith.constant 15 : index
    %265 = memref.load %arg1[%c15] : memref<64xf32, #tpu.memory_space<smem>>
    %266 = vector.broadcast %265 : f32 to vector<2x13x13xf32>
    %267 = arith.mulf %266, %264 : vector<2x13x13xf32>
    %268 = arith.addf %251, %267 : vector<2x13x13xf32>
    %c31 = arith.constant 31 : index
    %269 = memref.load %arg1[%c31] : memref<64xf32, #tpu.memory_space<smem>>
    %270 = vector.broadcast %269 : f32 to vector<2x13x13xf32>
    %271 = arith.mulf %270, %264 : vector<2x13x13xf32>
    %272 = arith.addf %255, %271 : vector<2x13x13xf32>
    %c47 = arith.constant 47 : index
    %273 = memref.load %arg1[%c47] : memref<64xf32, #tpu.memory_space<smem>>
    %274 = vector.broadcast %273 : f32 to vector<2x13x13xf32>
    %275 = arith.mulf %274, %264 : vector<2x13x13xf32>
    %276 = arith.addf %259, %275 : vector<2x13x13xf32>
    %c63 = arith.constant 63 : index
    %277 = memref.load %arg1[%c63] : memref<64xf32, #tpu.memory_space<smem>>
    %278 = vector.broadcast %277 : f32 to vector<2x13x13xf32>
    %279 = arith.mulf %278, %264 : vector<2x13x13xf32>
    %280 = arith.addf %263, %279 : vector<2x13x13xf32>
    %c0_6 = arith.constant 0 : index
    %c0_7 = arith.constant 0 : index
    %c0_8 = arith.constant 0 : index
    %c0_9 = arith.constant 0 : index
    %281 = vector.load %arg2[%c0_6, %c0_7, %c0_8, %c0_9] : memref<2x4x13x13xf32, #tpu.memory_space<vmem>>, vector<2x1x13x13xf32>
    %282 = vector.shape_cast %281 : vector<2x1x13x13xf32> to vector<2x13x13xf32>
    %283 = vector.shape_cast %268 : vector<2x13x13xf32> to vector<2x1x13x13xf32>
    tpu.vector_store %arg2[%c0_6, %c0_7, %c0_8, %c0_9], %283 {strides = array<i32>} : memref<2x4x13x13xf32, #tpu.memory_space<vmem>>, vector<2x1x13x13xf32>,
    %cst_10 = arith.constant 0.000000e+00 : f32
    %284 = vector.broadcast %cst_10 : f32 to vector<2x13x13xf32>
    %285 = arith.maximumf %268, %284 : vector<2x13x13xf32>
    %c0_11 = arith.constant 0 : index
    %c0_12 = arith.constant 0 : index
    %c0_13 = arith.constant 0 : index
    %c0_14 = arith.constant 0 : index
    %286 = vector.load %arg3[%c0_11, %c0_12, %c0_13, %c0_14] : memref<2x4x13x13xf32, #tpu.memory_space<vmem>>, vector<2x1x13x13xf32>
    %287 = vector.shape_cast %286 : vector<2x1x13x13xf32> to vector<2x13x13xf32>
    %288 = vector.shape_cast %285 : vector<2x13x13xf32> to vector<2x1x13x13xf32>
    tpu.vector_store %arg3[%c0_11, %c0_12, %c0_13, %c0_14], %288 {strides = array<i32>} : memref<2x4x13x13xf32, #tpu.memory_space<vmem>>, vector<2x1x13x13xf32>,
    %c0_15 = arith.constant 0 : index
    %c1_16 = arith.constant 1 : index
    %c0_17 = arith.constant 0 : index
    %c0_18 = arith.constant 0 : index
    %289 = vector.load %arg2[%c0_15, %c1_16, %c0_17, %c0_18] : memref<2x4x13x13xf32, #tpu.memory_space<vmem>>, vector<2x1x13x13xf32>
    %290 = vector.shape_cast %289 : vector<2x1x13x13xf32> to vector<2x13x13xf32>
    %291 = vector.shape_cast %272 : vector<2x13x13xf32> to vector<2x1x13x13xf32>
    tpu.vector_store %arg2[%c0_15, %c1_16, %c0_17, %c0_18], %291 {strides = array<i32>} : memref<2x4x13x13xf32, #tpu.memory_space<vmem>>, vector<2x1x13x13xf32>,
    %cst_19 = arith.constant 0.000000e+00 : f32
    %292 = vector.broadcast %cst_19 : f32 to vector<2x13x13xf32>
    %293 = arith.maximumf %272, %292 : vector<2x13x13xf32>
    %c0_20 = arith.constant 0 : index
    %c1_21 = arith.constant 1 : index
    %c0_22 = arith.constant 0 : index
    %c0_23 = arith.constant 0 : index
    %294 = vector.load %arg3[%c0_20, %c1_21, %c0_22, %c0_23] : memref<2x4x13x13xf32, #tpu.memory_space<vmem>>, vector<2x1x13x13xf32>
    %295 = vector.shape_cast %294 : vector<2x1x13x13xf32> to vector<2x13x13xf32>
    %296 = vector.shape_cast %293 : vector<2x13x13xf32> to vector<2x1x13x13xf32>
    tpu.vector_store %arg3[%c0_20, %c1_21, %c0_22, %c0_23], %296 {strides = array<i32>} : memref<2x4x13x13xf32, #tpu.memory_space<vmem>>, vector<2x1x13x13xf32>,
    %c0_24 = arith.constant 0 : index
    %c2_25 = arith.constant 2 : index
    %c0_26 = arith.constant 0 : index
    %c0_27 = arith.constant 0 : index
    %297 = vector.load %arg2[%c0_24, %c2_25, %c0_26, %c0_27] : memref<2x4x13x13xf32, #tpu.memory_space<vmem>>, vector<2x1x13x13xf32>
    %298 = vector.shape_cast %297 : vector<2x1x13x13xf32> to vector<2x13x13xf32>
    %299 = vector.shape_cast %276 : vector<2x13x13xf32> to vector<2x1x13x13xf32>
    tpu.vector_store %arg2[%c0_24, %c2_25, %c0_26, %c0_27], %299 {strides = array<i32>} : memref<2x4x13x13xf32, #tpu.memory_space<vmem>>, vector<2x1x13x13xf32>,
    %cst_28 = arith.constant 0.000000e+00 : f32
    %300 = vector.broadcast %cst_28 : f32 to vector<2x13x13xf32>
    %301 = arith.maximumf %276, %300 : vector<2x13x13xf32>
    %c0_29 = arith.constant 0 : index
    %c2_30 = arith.constant 2 : index
    %c0_31 = arith.constant 0 : index
    %c0_32 = arith.constant 0 : index
    %302 = vector.load %arg3[%c0_29, %c2_30, %c0_31, %c0_32] : memref<2x4x13x13xf32, #tpu.memory_space<vmem>>, vector<2x1x13x13xf32>
    %303 = vector.shape_cast %302 : vector<2x1x13x13xf32> to vector<2x13x13xf32>
    %304 = vector.shape_cast %301 : vector<2x13x13xf32> to vector<2x1x13x13xf32>
    tpu.vector_store %arg3[%c0_29, %c2_30, %c0_31, %c0_32], %304 {strides = array<i32>} : memref<2x4x13x13xf32, #tpu.memory_space<vmem>>, vector<2x1x13x13xf32>,
    %c0_33 = arith.constant 0 : index
    %c3_34 = arith.constant 3 : index
    %c0_35 = arith.constant 0 : index
    %c0_36 = arith.constant 0 : index
    %305 = vector.load %arg2[%c0_33, %c3_34, %c0_35, %c0_36] : memref<2x4x13x13xf32, #tpu.memory_space<vmem>>, vector<2x1x13x13xf32>
    %306 = vector.shape_cast %305 : vector<2x1x13x13xf32> to vector<2x13x13xf32>
    %307 = vector.shape_cast %280 : vector<2x13x13xf32> to vector<2x1x13x13xf32>
    tpu.vector_store %arg2[%c0_33, %c3_34, %c0_35, %c0_36], %307 {strides = array<i32>} : memref<2x4x13x13xf32, #tpu.memory_space<vmem>>, vector<2x1x13x13xf32>,
    %cst_37 = arith.constant 0.000000e+00 : f32
    %308 = vector.broadcast %cst_37 : f32 to vector<2x13x13xf32>
    %309 = arith.maximumf %280, %308 : vector<2x13x13xf32>
    %c0_38 = arith.constant 0 : index
    %c3_39 = arith.constant 3 : index
    %c0_40 = arith.constant 0 : index
    %c0_41 = arith.constant 0 : index
    %310 = vector.load %arg3[%c0_38, %c3_39, %c0_40, %c0_41] : memref<2x4x13x13xf32, #tpu.memory_space<vmem>>, vector<2x1x13x13xf32>
    %311 = vector.shape_cast %310 : vector<2x1x13x13xf32> to vector<2x13x13xf32>
    %312 = vector.shape_cast %309 : vector<2x13x13xf32> to vector<2x1x13x13xf32>
    tpu.vector_store %arg3[%c0_38, %c3_39, %c0_40, %c0_41], %312 {strides = array<i32>} : memref<2x4x13x13xf32, #tpu.memory_space<vmem>>, vector<2x1x13x13xf32>,
    return
  }
}

</mosaic_0001>

<llo_original>
// kernel: tpu_custom_call.1
$region0: #{tpu_custom_call.1}
  #allocation0 [shape = 'u32[]', space=smem, size = 0x4, offset = 0x4, fixed_abs, tag = 'smem constant byte address 0x4 - core index']
  #allocation1 [shape = 'u32[72,128]{1,0:T(1,128)}', space=vmem, size = 0x9000, scoped, tag = 'internal scratch']
  %s0 = inlined_call_operand.hbm [shape: f32[2,16,16], index: 0, kind: input, shape index: {}]
  %s1 = inlined_call_operand.hbm [shape: f32[64], index: 1, kind: input, shape index: {}]
  %s2 = inlined_call_operand.vmem [shape: f32[2,4,13,13], index: 2, kind: output, shape index: {0}]
  %s3 = inlined_call_operand.vmem [shape: f32[2,4,13,13], index: 3, kind: output, shape index: {1}]
  %4 = xla_tuple %s2, %s3
  %s5 = sld [smem:[#allocation0]]
  $region34: #{tpu_custom_call.1} parent=0
    _
  %s7 = ssub.s32 1, %s5
  %s8 = scalar_select 0, %s7, %s5
  $region1: #{tpu_custom_call.1} parent=0
    #allocation2 [shape = 'u8[16384]{0}', space=vmem, size = 0x4000, scoped, tag = 'input window, operand 0, single buffered']
    #allocation3 [shape = 's32[1]{0}', space=sflag, size = 0x4, scoped, tag = 'scoped memory for tpu_custom_call.1']
    #allocation4 [shape = 's32[1]{0}', space=sflag, size = 0x4, scoped, tag = 'scoped memory for tpu_custom_call.1']
    #allocation5 [shape = 'u8[512]{0}', space=smem, size = 0x200, scoped, tag = 'input window, operand 1, single buffered']
    %9 = vsyncpa [#allocation3], 0
    %10 = vsyncpa [#allocation4], 0
    // Predicated region
    $region2: #{tpu_custom_call.1} parent=1 // pred_check
      _
    $region3: #{tpu_custom_call.1} parent=1 // pred_check_branch
      %12 = sbr.rel (0) target = $region5
    $region4: #{tpu_custom_call.1} parent=1 // pred_region
      %14 = vsyncadd [#allocation3], 0
      %s15 = sshll.u32 %s0, 4
      %s16 = int_to_ptr.hbm [resolvable:$true] %s15
      %s17 = sshll.u32 [#allocation2], 4
      %s18 = int_to_ptr.vmem [resolvable:$true] %s17
      %23 = dma.hbm_to_vmem [thread:$0]  %s16, 512, %s18, [#allocation3], 128, 128, 8
    $region5: #{tpu_custom_call.1} parent=1 // pred_fallthru
      _
    // Predicated region
    $region6: #{tpu_custom_call.1} parent=1 // pred_check
      _
    $region7: #{tpu_custom_call.1} parent=1 // pred_check_branch
      %25 = sbr.rel (0) target = $region9
    $region8: #{tpu_custom_call.1} parent=1 // pred_region
      %27 = vsyncadd [#allocation4], 0
      %s29 = sshll.u32 %s1, 4
      %s30 = int_to_ptr.hbm [resolvable:$true] %s29
      %32 = dma.hbm_to_smem %s30, 16, [#allocation5], [#allocation4]
    $region9: #{tpu_custom_call.1} parent=1 // pred_fallthru
      _
    // Predicated region
    $region10: #{tpu_custom_call.1} parent=1 // pred_check
      _
    $region11: #{tpu_custom_call.1} parent=1 // pred_check_branch
      %34 = sbr.rel (0) target = $region13
    $region12: #{tpu_custom_call.1} parent=1 // pred_region
      %36 = dma.done [#allocation3], 512
    $region13: #{tpu_custom_call.1} parent=1 // pred_fallthru
      _
    // Predicated region
    $region14: #{tpu_custom_call.1} parent=1 // pred_check
      _
    $region15: #{tpu_custom_call.1} parent=1 // pred_check_branch
      %38 = sbr.rel (0) target = $region17
    $region16: #{tpu_custom_call.1} parent=1 // pred_region
      %40 = dma.done [#allocation4], 16
    $region17: #{tpu_custom_call.1} parent=1 // pred_fallthru
      _
    %41 = sfence
    %v42 = vld [vmem:[#allocation2] sm:$0xff]
    %v43 = vld [vmem:[#allocation2 + $0x8] sm:$0xff]
    %v44 = vld [vmem:[#allocation2 + $0x10] sm:$0xff]
    %v45 = vld [vmem:[#allocation2 + $0x18] sm:$0xff]
    %s46 = sld [smem:[#allocation5]]
    %v47 = vstv %s46
    %v48 = vmul.f32 %v47, %v42
    %v49 = vmul.f32 %v47, %v43
    %v50 = vmul.f32 %v47, %v44
    %v51 = vmul.f32 %v47, %v45
    %v52 = vadd.f32 %v48, 0.0
    %v53 = vadd.f32 %v49, 0.0
    %v54 = vadd.f32 %v50, 0.0
    %v55 = vadd.f32 %v51, 0.0
    %s56 = sld [smem:[#allocation5 + $0x10]]
    %v57 = vstv %s56
    %v58 = vmul.f32 %v57, %v42
    %v59 = vmul.f32 %v57, %v43
    %v60 = vmul.f32 %v57, %v44
    %v61 = vmul.f32 %v57, %v45
    %v62 = vadd.f32 %v58, 0.0
    %v63 = vadd.f32 %v59, 0.0
    %v64 = vadd.f32 %v60, 0.0
    %v65 = vadd.f32 %v61, 0.0
    %s66 = sld [smem:[#allocation5 + $0x20]]
    %v67 = vstv %s66
    %v68 = vmul.f32 %v67, %v42
    %v69 = vmul.f32 %v67, %v43
    %v70 = vmul.f32 %v67, %v44
    %v71 = vmul.f32 %v67, %v45
    %v72 = vadd.f32 %v68, 0.0
    %v73 = vadd.f32 %v69, 0.0
    %v74 = vadd.f32 %v70, 0.0
    %v75 = vadd.f32 %v71, 0.0
    %s76 = sld [smem:[#allocation5 + $0x30]]
    %v77 = vstv %s76
    %v78 = vmul.f32 %v77, %v42
    %v79 = vmul.f32 %v77, %v43
    %v80 = vmul.f32 %v77, %v44
    %v81 = vmul.f32 %v77, %v45
    %v82 = vadd.f32 %v78, 0.0
    %v83 = vadd.f32 %v79, 0.0
    %v84 = vadd.f32 %v80, 0.0
    %v85 = vadd.f32 %v81, 0.0
    %s86 = sld [smem:[#allocation5 + $0x4]]
    %v87 = vstv %s86
    %v88 = vmul.f32 %v87, %v42
    %v89 = vmul.f32 %v87, %v43
    %v90 = vmul.f32 %v87, %v44
    %v91 = vmul.f32 %v87, %v45
    %vm96 = vcmask 1046528
    %v97 = vrot.slane %v88, 1
    %v98 = vrot.slane %v89, 1
    %v99 = vsel %vm96, %v97, %v98
    %v100 = vrot.slane %v90, 1
    %v101 = vrot.slane %v91, 1
    %v102 = vsel %vm96, %v100, %v101
    %v107 = vadd.f32 %v52, %v99
    %v108 = vadd.f32 %v53, %v98
    %v109 = vadd.f32 %v54, %v102
    %v110 = vadd.f32 %v55, %v101
    %s111 = sld [smem:[#allocation5 + $0x14]]
    %v112 = vstv %s111
    %v113 = vmul.f32 %v112, %v42
    %v114 = vmul.f32 %v112, %v43
    %v115 = vmul.f32 %v112, %v44
    %v116 = vmul.f32 %v112, %v45
    %v121 = vrot.slane %v113, 1
    %v122 = vrot.slane %v114, 1
    %v123 = vsel %vm96, %v121, %v122
    %v124 = vrot.slane %v115, 1
    %v125 = vrot.slane %v116, 1
    %v126 = vsel %vm96, %v124, %v125
    %v131 = vadd.f32 %v62, %v123
    %v132 = vadd.f32 %v63, %v122
    %v133 = vadd.f32 %v64, %v126
    %v134 = vadd.f32 %v65, %v125
    %s135 = sld [smem:[#allocation5 + $0x24]]
    %v136 = vstv %s135
    %v137 = vmul.f32 %v136, %v42
    %v138 = vmul.f32 %v136, %v43
    %v139 = vmul.f32 %v136, %v44
    %v140 = vmul.f32 %v136, %v45
    %v145 = vrot.slane %v137, 1
    %v146 = vrot.slane %v138, 1
    %v147 = vsel %vm96, %v145, %v146
    %v148 = vrot.slane %v139, 1
    %v149 = vrot.slane %v140, 1
    %v150 = vsel %vm96, %v148, %v149
    %v155 = vadd.f32 %v72, %v147
    %v156 = vadd.f32 %v73, %v146
    %v157 = vadd.f32 %v74, %v150
    %v158 = vadd.f32 %v75, %v149
    %s159 = sld [smem:[#allocation5 + $0x34]]
    %v160 = vstv %s159
    %v161 = vmul.f32 %v160, %v42
    %v162 = vmul.f32 %v160, %v43
    %v163 = vmul.f32 %v160, %v44
    %v164 = vmul.f32 %v160, %v45
    %v169 = vrot.slane %v161, 1
    %v170 = vrot.slane %v162, 1
    %v171 = vsel %vm96, %v169, %v170
    %v172 = vrot.slane %v163, 1
    %v173 = vrot.slane %v164, 1
    %v174 = vsel %vm96, %v172, %v173
    %v179 = vadd.f32 %v82, %v171
    %v180 = vadd.f32 %v83, %v170
    %v181 = vadd.f32 %v84, %v174
    %v182 = vadd.f32 %v85, %v173
    %s183 = sld [smem:[#allocation5 + $0x8]]
    %v184 = vstv %s183
    %v185 = vmul.f32 %v184, %v42
    %v186 = vmul.f32 %v184, %v43
    %v187 = vmul.f32 %v184, %v44
    %v188 = vmul.f32 %v184, %v45
    %vm193 = vcmask 1045504
    %v194 = vrot.slane %v185, 2
    %v195 = vrot.slane %v186, 2
    %v196 = vsel %vm193, %v194, %v195
    %v197 = vrot.slane %v187, 2
    %v198 = vrot.slane %v188, 2
    %v199 = vsel %vm193, %v197, %v198
    %v204 = vadd.f32 %v107, %v196
    %v205 = vadd.f32 %v108, %v195
    %v206 = vadd.f32 %v109, %v199
    %v207 = vadd.f32 %v110, %v198
    %s208 = sld [smem:[#allocation5 + $0x18]]
    %v209 = vstv %s208
    %v210 = vmul.f32 %v209, %v42
    %v211 = vmul.f32 %v209, %v43
    %v212 = vmul.f32 %v209, %v44
    %v213 = vmul.f32 %v209, %v45
    %v218 = vrot.slane %v210, 2
    %v219 = vrot.slane %v211, 2
    %v220 = vsel %vm193, %v218, %v219
    %v221 = vrot.slane %v212, 2
    %v222 = vrot.slane %v213, 2
    %v223 = vsel %vm193, %v221, %v222
    %v228 = vadd.f32 %v131, %v220
    %v229 = vadd.f32 %v132, %v219
    %v230 = vadd.f32 %v133, %v223
    %v231 = vadd.f32 %v134, %v222
    %s232 = sld [smem:[#allocation5 + $0x28]]
    %v233 = vstv %s232
    %v234 = vmul.f32 %v233, %v42
    %v235 = vmul.f32 %v233, %v43
    %v236 = vmul.f32 %v233, %v44
    %v237 = vmul.f32 %v233, %v45
    %v242 = vrot.slane %v234, 2
    %v243 = vrot.slane %v235, 2
    %v244 = vsel %vm193, %v242, %v243
    %v245 = vrot.slane %v236, 2
    %v246 = vrot.slane %v237, 2
    %v247 = vsel %vm193, %v245, %v246
    %v252 = vadd.f32 %v155, %v244
    %v253 = vadd.f32 %v156, %v243
    %v254 = vadd.f32 %v157, %v247
    %v255 = vadd.f32 %v158, %v246
    %s256 = sld [smem:[#allocation5 + $0x38]]
    %v257 = vstv %s256
    %v258 = vmul.f32 %v257, %v42
    %v259 = vmul.f32 %v257, %v43
    %v260 = vmul.f32 %v257, %v44
    %v261 = vmul.f32 %v257, %v45
    %v266 = vrot.slane %v258, 2
    %v267 = vrot.slane %v259, 2
    %v268 = vsel %vm193, %v266, %v267
    %v269 = vrot.slane %v260, 2
    %v270 = vrot.slane %v261, 2
    %v271 = vsel %vm193, %v269, %v270
    %v276 = vadd.f32 %v179, %v268
    %v277 = vadd.f32 %v180, %v267
    %v278 = vadd.f32 %v181, %v271
    %v279 = vadd.f32 %v182, %v270
    %s280 = sld [smem:[#allocation5 + $0xc]]
    %v281 = vstv %s280
    %v282 = vmul.f32 %v281, %v42
    %v283 = vmul.f32 %v281, %v43
    %v284 = vmul.f32 %v281, %v44
    %v285 = vmul.f32 %v281, %v45
    %vm290 = vcmask 1044480
    %v291 = vrot.slane %v282, 3
    %v292 = vrot.slane %v283, 3
    %v293 = vsel %vm290, %v291, %v292
    %v294 = vrot.slane %v284, 3
    %v295 = vrot.slane %v285, 3
    %v296 = vsel %vm290, %v294, %v295
    %v301 = vadd.f32 %v204, %v293
    %v302 = vadd.f32 %v205, %v292
    %v303 = vadd.f32 %v206, %v296
    %v304 = vadd.f32 %v207, %v295
    %s305 = sld [smem:[#allocation5 + $0x1c]]
    %v306 = vstv %s305
    %v307 = vmul.f32 %v306, %v42
    %v308 = vmul.f32 %v306, %v43
    %v309 = vmul.f32 %v306, %v44
    %v310 = vmul.f32 %v306, %v45
    %v315 = vrot.slane %v307, 3
    %v316 = vrot.slane %v308, 3
    %v317 = vsel %vm290, %v315, %v316
    %v318 = vrot.slane %v309, 3
    %v319 = vrot.slane %v310, 3
    %v320 = vsel %vm290, %v318, %v319
    %v325 = vadd.f32 %v228, %v317
    %v326 = vadd.f32 %v229, %v316
    %v327 = vadd.f32 %v230, %v320
    %v328 = vadd.f32 %v231, %v319
    %s329 = sld [smem:[#allocation5 + $0x2c]]
    %v330 = vstv %s329
    %v331 = vmul.f32 %v330, %v42
    %v332 = vmul.f32 %v330, %v43
    %v333 = vmul.f32 %v330, %v44
    %v334 = vmul.f32 %v330, %v45
    %v339 = vrot.slane %v331, 3
    %v340 = vrot.slane %v332, 3
    %v341 = vsel %vm290, %v339, %v340
    %v342 = vrot.slane %v333, 3
    %v343 = vrot.slane %v334, 3
    %v344 = vsel %vm290, %v342, %v343
    %v349 = vadd.f32 %v252, %v341
    %v350 = vadd.f32 %v253, %v340
    %v351 = vadd.f32 %v254, %v344
    %v352 = vadd.f32 %v255, %v343
    %s353 = sld [smem:[#allocation5 + $0x3c]]
    %v354 = vstv %s353
    %v355 = vmul.f32 %v354, %v42
    %v356 = vmul.f32 %v354, %v43
    %v357 = vmul.f32 %v354, %v44
    %v358 = vmul.f32 %v354, %v45
    %v363 = vrot.slane %v355, 3
    %v364 = vrot.slane %v356, 3
    %v365 = vsel %vm290, %v363, %v364
    %v366 = vrot.slane %v357, 3
    %v367 = vrot.slane %v358, 3
    %v368 = vsel %vm290, %v366, %v367
    %v373 = vadd.f32 %v276, %v365
    %v374 = vadd.f32 %v277, %v364
    %v375 = vadd.f32 %v278, %v368
    %v376 = vadd.f32 %v279, %v367
    %s377 = sld [smem:[#allocation5 + $0x1]]
    %v378 = vstv %s377
    %v379 = vmul.f32 %v378, %v42
    %v380 = vmul.f32 %v378, %v43
    %v381 = vmul.f32 %v378, %v44
    %v382 = vmul.f32 %v378, %v45
    %387 = vrot.lane.b32.xlu0 %v379, 127
    %v388 = vpop.permute.xlu0 %387
    %389 = vrot.lane.b32.xlu0 %v380, 127
    %v390 = vpop.permute.xlu0 %389
    %391 = vrot.lane.b32.xlu0 %v381, 127
    %v392 = vpop.permute.xlu0 %391
    %393 = vrot.lane.b32.xlu0 %v382, 127
    %v394 = vpop.permute.xlu0 %393
    %v399 = vadd.f32 %v301, %v388
    %v400 = vadd.f32 %v302, %v390
    %v401 = vadd.f32 %v303, %v392
    %v402 = vadd.f32 %v304, %v394
    %s403 = sld [smem:[#allocation5 + $0x11]]
    %v404 = vstv %s403
    %v405 = vmul.f32 %v404, %v42
    %v406 = vmul.f32 %v404, %v43
    %v407 = vmul.f32 %v404, %v44
    %v408 = vmul.f32 %v404, %v45
    %413 = vrot.lane.b32.xlu0 %v405, 127
    %v414 = vpop.permute.xlu0 %413
    %415 = vrot.lane.b32.xlu0 %v406, 127
    %v416 = vpop.permute.xlu0 %415
    %417 = vrot.lane.b32.xlu0 %v407, 127
    %v418 = vpop.permute.xlu0 %417
    %419 = vrot.lane.b32.xlu0 %v408, 127
    %v420 = vpop.permute.xlu0 %419
    %v425 = vadd.f32 %v325, %v414
    %v426 = vadd.f32 %v326, %v416
    %v427 = vadd.f32 %v327, %v418
    %v428 = vadd.f32 %v328, %v420
    %s429 = sld [smem:[#allocation5 + $0x21]]
    %v430 = vstv %s429
    %v431 = vmul.f32 %v430, %v42
    %v432 = vmul.f32 %v430, %v43
    %v433 = vmul.f32 %v430, %v44
    %v434 = vmul.f32 %v430, %v45
    %439 = vrot.lane.b32.xlu0 %v431, 127
    %v440 = vpop.permute.xlu0 %439
    %441 = vrot.lane.b32.xlu0 %v432, 127
    %v442 = vpop.permute.xlu0 %441
    %443 = vrot.lane.b32.xlu0 %v433, 127
    %v444 = vpop.permute.xlu0 %443
    %445 = vrot.lane.b32.xlu0 %v434, 127
    %v446 = vpop.permute.xlu0 %445
    %v451 = vadd.f32 %v349, %v440
    %v452 = vadd.f32 %v350, %v442
    %v453 = vadd.f32 %v351, %v444
    %v454 = vadd.f32 %v352, %v446
    %s455 = sld [smem:[#allocation5 + $0x31]]
    %v456 = vstv %s455
    %v457 = vmul.f32 %v456, %v42
    %v458 = vmul.f32 %v456, %v43
    %v459 = vmul.f32 %v456, %v44
    %v460 = vmul.f32 %v456, %v45
    %465 = vrot.lane.b32.xlu0 %v457, 127
    %v466 = vpop.permute.xlu0 %465
    %467 = vrot.lane.b32.xlu0 %v458, 127
    %v468 = vpop.permute.xlu0 %467
    %469 = vrot.lane.b32.xlu0 %v459, 127
    %v470 = vpop.permute.xlu0 %469
    %471 = vrot.lane.b32.xlu0 %v460, 127
    %v472 = vpop.permute.xlu0 %471
    %v477 = vadd.f32 %v373, %v466
    %v478 = vadd.f32 %v374, %v468
    %v479 = vadd.f32 %v375, %v470
    %v480 = vadd.f32 %v376, %v472
    %s481 = sld [smem:[#allocation5 + $0x5]]
    %v482 = vstv %s481
    %v483 = vmul.f32 %v482, %v42
    %v484 = vmul.f32 %v482, %v43
    %v485 = vmul.f32 %v482, %v44
    %v486 = vmul.f32 %v482, %v45
    %v491 = vrot.slane %v483, 1
    %v492 = vrot.slane %v484, 1
    %v493 = vsel %vm96, %v491, %v492
    %v494 = vrot.slane %v485, 1
    %v495 = vrot.slane %v486, 1
    %v496 = vsel %vm96, %v494, %v495
    %497 = vrot.lane.b32.xlu0 %v493, 127
    %v498 = vpop.permute.xlu0 %497
    %499 = vrot.lane.b32.xlu0 %v492, 127
    %v500 = vpop.permute.xlu0 %499
    %501 = vrot.lane.b32.xlu0 %v496, 127
    %v502 = vpop.permute.xlu0 %501
    %503 = vrot.lane.b32.xlu0 %v495, 127
    %v504 = vpop.permute.xlu0 %503
    %v509 = vadd.f32 %v399, %v498
    %v510 = vadd.f32 %v400, %v500
    %v511 = vadd.f32 %v401, %v502
    %v512 = vadd.f32 %v402, %v504
    %s513 = sld [smem:[#allocation5 + $0x15]]
    %v514 = vstv %s513
    %v515 = vmul.f32 %v514, %v42
    %v516 = vmul.f32 %v514, %v43
    %v517 = vmul.f32 %v514, %v44
    %v518 = vmul.f32 %v514, %v45
    %v523 = vrot.slane %v515, 1
    %v524 = vrot.slane %v516, 1
    %v525 = vsel %vm96, %v523, %v524
    %v526 = vrot.slane %v517, 1
    %v527 = vrot.slane %v518, 1
    %v528 = vsel %vm96, %v526, %v527
    %529 = vrot.lane.b32.xlu0 %v525, 127
    %v530 = vpop.permute.xlu0 %529
    %531 = vrot.lane.b32.xlu0 %v524, 127
    %v532 = vpop.permute.xlu0 %531
    %533 = vrot.lane.b32.xlu0 %v528, 127
    %v534 = vpop.permute.xlu0 %533
    %535 = vrot.lane.b32.xlu0 %v527, 127
    %v536 = vpop.permute.xlu0 %535
    %v541 = vadd.f32 %v425, %v530
    %v542 = vadd.f32 %v426, %v532
    %v543 = vadd.f32 %v427, %v534
    %v544 = vadd.f32 %v428, %v536
    %s545 = sld [smem:[#allocation5 + $0x25]]
    %v546 = vstv %s545
    %v547 = vmul.f32 %v546, %v42
    %v548 = vmul.f32 %v546, %v43
    %v549 = vmul.f32 %v546, %v44
    %v550 = vmul.f32 %v546, %v45
    %v555 = vrot.slane %v547, 1
    %v556 = vrot.slane %v548, 1
    %v557 = vsel %vm96, %v555, %v556
    %v558 = vrot.slane %v549, 1
    %v559 = vrot.slane %v550, 1
    %v560 = vsel %vm96, %v558, %v559
    %561 = vrot.lane.b32.xlu0 %v557, 127
    %v562 = vpop.permute.xlu0 %561
    %563 = vrot.lane.b32.xlu0 %v556, 127
    %v564 = vpop.permute.xlu0 %563
    %565 = vrot.lane.b32.xlu0 %v560, 127
    %v566 = vpop.permute.xlu0 %565
    %567 = vrot.lane.b32.xlu0 %v559, 127
    %v568 = vpop.permute.xlu0 %567
    %v573 = vadd.f32 %v451, %v562
    %v574 = vadd.f32 %v452, %v564
    %v575 = vadd.f32 %v453, %v566
    %v576 = vadd.f32 %v454, %v568
    %s577 = sld [smem:[#allocation5 + $0x35]]
    %v578 = vstv %s577
    %v579 = vmul.f32 %v578, %v42
    %v580 = vmul.f32 %v578, %v43
    %v581 = vmul.f32 %v578, %v44
    %v582 = vmul.f32 %v578, %v45
    %v587 = vrot.slane %v579, 1
    %v588 = vrot.slane %v580, 1
    %v589 = vsel %vm96, %v587, %v588
    %v590 = vrot.slane %v581, 1
    %v591 = vrot.slane %v582, 1
    %v592 = vsel %vm96, %v590, %v591
    %593 = vrot.lane.b32.xlu0 %v589, 127
    %v594 = vpop.permute.xlu0 %593
    %595 = vrot.lane.b32.xlu0 %v588, 127
    %v596 = vpop.permute.xlu0 %595
    %597 = vrot.lane.b32.xlu0 %v592, 127
    %v598 = vpop.permute.xlu0 %597
    %599 = vrot.lane.b32.xlu0 %v591, 127
    %v600 = vpop.permute.xlu0 %599
    %v605 = vadd.f32 %v477, %v594
    %v606 = vadd.f32 %v478, %v596
    %v607 = vadd.f32 %v479, %v598
    %v608 = vadd.f32 %v480, %v600
    %s609 = sld [smem:[#allocation5 + $0x9]]
    %v610 = vstv %s609
    %v611 = vmul.f32 %v610, %v42
    %v612 = vmul.f32 %v610, %v43
    %v613 = vmul.f32 %v610, %v44
    %v614 = vmul.f32 %v610, %v45
    %v619 = vrot.slane %v611, 2
    %v620 = vrot.slane %v612, 2
    %v621 = vsel %vm193, %v619, %v620
    %v622 = vrot.slane %v613, 2
    %v623 = vrot.slane %v614, 2
    %v624 = vsel %vm193, %v622, %v623
    %625 = vrot.lane.b32.xlu0 %v621, 127
    %v626 = vpop.permute.xlu0 %625
    %627 = vrot.lane.b32.xlu0 %v620, 127
    %v628 = vpop.permute.xlu0 %627
    %629 = vrot.lane.b32.xlu0 %v624, 127
    %v630 = vpop.permute.xlu0 %629
    %631 = vrot.lane.b32.xlu0 %v623, 127
    %v632 = vpop.permute.xlu0 %631
    %v637 = vadd.f32 %v509, %v626
    %v638 = vadd.f32 %v510, %v628
    %v639 = vadd.f32 %v511, %v630
    %v640 = vadd.f32 %v512, %v632
    %s641 = sld [smem:[#allocation5 + $0x19]]
    %v642 = vstv %s641
    %v643 = vmul.f32 %v642, %v42
    %v644 = vmul.f32 %v642, %v43
    %v645 = vmul.f32 %v642, %v44
    %v646 = vmul.f32 %v642, %v45
    %v651 = vrot.slane %v643, 2
    %v652 = vrot.slane %v644, 2
    %v653 = vsel %vm193, %v651, %v652
    %v654 = vrot.slane %v645, 2
    %v655 = vrot.slane %v646, 2
    %v656 = vsel %vm193, %v654, %v655
    %657 = vrot.lane.b32.xlu0 %v653, 127
    %v658 = vpop.permute.xlu0 %657
    %659 = vrot.lane.b32.xlu0 %v652, 127
    %v660 = vpop.permute.xlu0 %659
    %661 = vrot.lane.b32.xlu0 %v656, 127
    %v662 = vpop.permute.xlu0 %661
    %663 = vrot.lane.b32.xlu0 %v655, 127
    %v664 = vpop.permute.xlu0 %663
    %v669 = vadd.f32 %v541, %v658
    %v670 = vadd.f32 %v542, %v660
    %v671 = vadd.f32 %v543, %v662
    %v672 = vadd.f32 %v544, %v664
    %s673 = sld [smem:[#allocation5 + $0x29]]
    %v674 = vstv %s673
    %v675 = vmul.f32 %v674, %v42
    %v676 = vmul.f32 %v674, %v43
    %v677 = vmul.f32 %v674, %v44
    %v678 = vmul.f32 %v674, %v45
    %v683 = vrot.slane %v675, 2
    %v684 = vrot.slane %v676, 2
    %v685 = vsel %vm193, %v683, %v684
    %v686 = vrot.slane %v677, 2
    %v687 = vrot.slane %v678, 2
    %v688 = vsel %vm193, %v686, %v687
    %689 = vrot.lane.b32.xlu0 %v685, 127
    %v690 = vpop.permute.xlu0 %689
    %691 = vrot.lane.b32.xlu0 %v684, 127
    %v692 = vpop.permute.xlu0 %691
    %693 = vrot.lane.b32.xlu0 %v688, 127
    %v694 = vpop.permute.xlu0 %693
    %695 = vrot.lane.b32.xlu0 %v687, 127
    %v696 = vpop.permute.xlu0 %695
    %v701 = vadd.f32 %v573, %v690
    %v702 = vadd.f32 %v574, %v692
    %v703 = vadd.f32 %v575, %v694
    %v704 = vadd.f32 %v576, %v696
    %s705 = sld [smem:[#allocation5 + $0x39]]
    %v706 = vstv %s705
    %v707 = vmul.f32 %v706, %v42
    %v708 = vmul.f32 %v706, %v43
    %v709 = vmul.f32 %v706, %v44
    %v710 = vmul.f32 %v706, %v45
    %v715 = vrot.slane %v707, 2
    %v716 = vrot.slane %v708, 2
    %v717 = vsel %vm193, %v715, %v716
    %v718 = vrot.slane %v709, 2
    %v719 = vrot.slane %v710, 2
    %v720 = vsel %vm193, %v718, %v719
    %721 = vrot.lane.b32.xlu0 %v717, 127
    %v722 = vpop.permute.xlu0 %721
    %723 = vrot.lane.b32.xlu0 %v716, 127
    %v724 = vpop.permute.xlu0 %723
    %725 = vrot.lane.b32.xlu0 %v720, 127
    %v726 = vpop.permute.xlu0 %725
    %727 = vrot.lane.b32.xlu0 %v719, 127
    %v728 = vpop.permute.xlu0 %727
    %v733 = vadd.f32 %v605, %v722
    %v734 = vadd.f32 %v606, %v724
    %v735 = vadd.f32 %v607, %v726
    %v736 = vadd.f32 %v608, %v728
    %s737 = sld [smem:[#allocation5 + $0xd]]
    %v738 = vstv %s737
    %v739 = vmul.f32 %v738, %v42
    %v740 = vmul.f32 %v738, %v43
    %v741 = vmul.f32 %v738, %v44
    %v742 = vmul.f32 %v738, %v45
    %v747 = vrot.slane %v739, 3
    %v748 = vrot.slane %v740, 3
    %v749 = vsel %vm290, %v747, %v748
    %v750 = vrot.slane %v741, 3
    %v751 = vrot.slane %v742, 3
    %v752 = vsel %vm290, %v750, %v751
    %753 = vrot.lane.b32.xlu0 %v749, 127
    %v754 = vpop.permute.xlu0 %753
    %755 = vrot.lane.b32.xlu0 %v748, 127
    %v756 = vpop.permute.xlu0 %755
    %757 = vrot.lane.b32.xlu0 %v752, 127
    %v758 = vpop.permute.xlu0 %757
    %759 = vrot.lane.b32.xlu0 %v751, 127
    %v760 = vpop.permute.xlu0 %759
    %v765 = vadd.f32 %v637, %v754
    %v766 = vadd.f32 %v638, %v756
    %v767 = vadd.f32 %v639, %v758
    %v768 = vadd.f32 %v640, %v760
    %s769 = sld [smem:[#allocation5 + $0x1d]]
    %v770 = vstv %s769
    %v771 = vmul.f32 %v770, %v42
    %v772 = vmul.f32 %v770, %v43
    %v773 = vmul.f32 %v770, %v44
    %v774 = vmul.f32 %v770, %v45
    %v779 = vrot.slane %v771, 3
    %v780 = vrot.slane %v772, 3
    %v781 = vsel %vm290, %v779, %v780
    %v782 = vrot.slane %v773, 3
    %v783 = vrot.slane %v774, 3
    %v784 = vsel %vm290, %v782, %v783
    %785 = vrot.lane.b32.xlu0 %v781, 127
    %v786 = vpop.permute.xlu0 %785
    %787 = vrot.lane.b32.xlu0 %v780, 127
    %v788 = vpop.permute.xlu0 %787
    %789 = vrot.lane.b32.xlu0 %v784, 127
    %v790 = vpop.permute.xlu0 %789
    %791 = vrot.lane.b32.xlu0 %v783, 127
    %v792 = vpop.permute.xlu0 %791
    %v797 = vadd.f32 %v669, %v786
    %v798 = vadd.f32 %v670, %v788
    %v799 = vadd.f32 %v671, %v790
    %v800 = vadd.f32 %v672, %v792
    %s801 = sld [smem:[#allocation5 + $0x2d]]
    %v802 = vstv %s801
    %v803 = vmul.f32 %v802, %v42
    %v804 = vmul.f32 %v802, %v43
    %v805 = vmul.f32 %v802, %v44
    %v806 = vmul.f32 %v802, %v45
    %v811 = vrot.slane %v803, 3
    %v812 = vrot.slane %v804, 3
    %v813 = vsel %vm290, %v811, %v812
    %v814 = vrot.slane %v805, 3
    %v815 = vrot.slane %v806, 3
    %v816 = vsel %vm290, %v814, %v815
    %817 = vrot.lane.b32.xlu0 %v813, 127
    %v818 = vpop.permute.xlu0 %817
    %819 = vrot.lane.b32.xlu0 %v812, 127
    %v820 = vpop.permute.xlu0 %819
    %821 = vrot.lane.b32.xlu0 %v816, 127
    %v822 = vpop.permute.xlu0 %821
    %823 = vrot.lane.b32.xlu0 %v815, 127
    %v824 = vpop.permute.xlu0 %823
    %v829 = vadd.f32 %v701, %v818
    %v830 = vadd.f32 %v702, %v820
    %v831 = vadd.f32 %v703, %v822
    %v832 = vadd.f32 %v704, %v824
    %s833 = sld [smem:[#allocation5 + $0x3d]]
    %v834 = vstv %s833
    %v835 = vmul.f32 %v834, %v42
    %v836 = vmul.f32 %v834, %v43
    %v837 = vmul.f32 %v834, %v44
    %v838 = vmul.f32 %v834, %v45
    %v843 = vrot.slane %v835, 3
    %v844 = vrot.slane %v836, 3
    %v845 = vsel %vm290, %v843, %v844
    %v846 = vrot.slane %v837, 3
    %v847 = vrot.slane %v838, 3
    %v848 = vsel %vm290, %v846, %v847
    %849 = vrot.lane.b32.xlu0 %v845, 127
    %v850 = vpop.permute.xlu0 %849
    %851 = vrot.lane.b32.xlu0 %v844, 127
    %v852 = vpop.permute.xlu0 %851
    %853 = vrot.lane.b32.xlu0 %v848, 127
    %v854 = vpop.permute.xlu0 %853
    %855 = vrot.lane.b32.xlu0 %v847, 127
    %v856 = vpop.permute.xlu0 %855
    %v861 = vadd.f32 %v733, %v850
    %v862 = vadd.f32 %v734, %v852
    %v863 = vadd.f32 %v735, %v854
    %v864 = vadd.f32 %v736, %v856
    %s865 = sld [smem:[#allocation5 + $0x2]]
    %v866 = vstv %s865
    %v867 = vmul.f32 %v866, %v42
    %v868 = vmul.f32 %v866, %v43
    %v869 = vmul.f32 %v866, %v44
    %v870 = vmul.f32 %v866, %v45
    %875 = vrot.lane.b32.xlu0 %v867, 126
    %v876 = vpop.permute.xlu0 %875
    %877 = vrot.lane.b32.xlu0 %v868, 126
    %v878 = vpop.permute.xlu0 %877
    %879 = vrot.lane.b32.xlu0 %v869, 126
    %v880 = vpop.permute.xlu0 %879
    %881 = vrot.lane.b32.xlu0 %v870, 126
    %v882 = vpop.permute.xlu0 %881
    %v887 = vadd.f32 %v765, %v876
    %v888 = vadd.f32 %v766, %v878
    %v889 = vadd.f32 %v767, %v880
    %v890 = vadd.f32 %v768, %v882
    %s891 = sld [smem:[#allocation5 + $0x12]]
    %v892 = vstv %s891
    %v893 = vmul.f32 %v892, %v42
    %v894 = vmul.f32 %v892, %v43
    %v895 = vmul.f32 %v892, %v44
    %v896 = vmul.f32 %v892, %v45
    %901 = vrot.lane.b32.xlu0 %v893, 126
    %v902 = vpop.permute.xlu0 %901
    %903 = vrot.lane.b32.xlu0 %v894, 126
    %v904 = vpop.permute.xlu0 %903
    %905 = vrot.lane.b32.xlu0 %v895, 126
    %v906 = vpop.permute.xlu0 %905
    %907 = vrot.lane.b32.xlu0 %v896, 126
    %v908 = vpop.permute.xlu0 %907
    %v913 = vadd.f32 %v797, %v902
    %v914 = vadd.f32 %v798, %v904
    %v915 = vadd.f32 %v799, %v906
    %v916 = vadd.f32 %v800, %v908
    %s917 = sld [smem:[#allocation5 + $0x22]]
    %v918 = vstv %s917
    %v919 = vmul.f32 %v918, %v42
    %v920 = vmul.f32 %v918, %v43
    %v921 = vmul.f32 %v918, %v44
    %v922 = vmul.f32 %v918, %v45
    %927 = vrot.lane.b32.xlu0 %v919, 126
    %v928 = vpop.permute.xlu0 %927
    %929 = vrot.lane.b32.xlu0 %v920, 126
    %v930 = vpop.permute.xlu0 %929
    %931 = vrot.lane.b32.xlu0 %v921, 126
    %v932 = vpop.permute.xlu0 %931
    %933 = vrot.lane.b32.xlu0 %v922, 126
    %v934 = vpop.permute.xlu0 %933
    %v939 = vadd.f32 %v829, %v928
    %v940 = vadd.f32 %v830, %v930
    %v941 = vadd.f32 %v831, %v932
    %v942 = vadd.f32 %v832, %v934
    %s943 = sld [smem:[#allocation5 + $0x32]]
    %v944 = vstv %s943
    %v945 = vmul.f32 %v944, %v42
    %v946 = vmul.f32 %v944, %v43
    %v947 = vmul.f32 %v944, %v44
    %v948 = vmul.f32 %v944, %v45
    %953 = vrot.lane.b32.xlu0 %v945, 126
    %v954 = vpop.permute.xlu0 %953
    %955 = vrot.lane.b32.xlu0 %v946, 126
    %v956 = vpop.permute.xlu0 %955
    %957 = vrot.lane.b32.xlu0 %v947, 126
    %v958 = vpop.permute.xlu0 %957
    %959 = vrot.lane.b32.xlu0 %v948, 126
    %v960 = vpop.permute.xlu0 %959
    %v965 = vadd.f32 %v861, %v954
    %v966 = vadd.f32 %v862, %v956
    %v967 = vadd.f32 %v863, %v958
    %v968 = vadd.f32 %v864, %v960
    %s969 = sld [smem:[#allocation5 + $0x6]]
    %v970 = vstv %s969
    %v971 = vmul.f32 %v970, %v42
    %v972 = vmul.f32 %v970, %v43
    %v973 = vmul.f32 %v970, %v44
    %v974 = vmul.f32 %v970, %v45
    %v979 = vrot.slane %v971, 1
    %v980 = vrot.slane %v972, 1
    %v981 = vsel %vm96, %v979, %v980
    %v982 = vrot.slane %v973, 1
    %v983 = vrot.slane %v974, 1
    %v984 = vsel %vm96, %v982, %v983
    %985 = vrot.lane.b32.xlu0 %v981, 126
    %v986 = vpop.permute.xlu0 %985
    %987 = vrot.lane.b32.xlu0 %v980, 126
    %v988 = vpop.permute.xlu0 %987
    %989 = vrot.lane.b32.xlu0 %v984, 126
    %v990 = vpop.permute.xlu0 %989
    %991 = vrot.lane.b32.xlu0 %v983, 126
    %v992 = vpop.permute.xlu0 %991
    %v997 = vadd.f32 %v887, %v986
    %v998 = vadd.f32 %v888, %v988
    %v999 = vadd.f32 %v889, %v990
    %v1000 = vadd.f32 %v890, %v992
    %s1001 = sld [smem:[#allocation5 + $0x16]]
    %v1002 = vstv %s1001
    %v1003 = vmul.f32 %v1002, %v42
    %v1004 = vmul.f32 %v1002, %v43
    %v1005 = vmul.f32 %v1002, %v44
    %v1006 = vmul.f32 %v1002, %v45
    %v1011 = vrot.slane %v1003, 1
    %v1012 = vrot.slane %v1004, 1
    %v1013 = vsel %vm96, %v1011, %v1012
    %v1014 = vrot.slane %v1005, 1
    %v1015 = vrot.slane %v1006, 1
    %v1016 = vsel %vm96, %v1014, %v1015
    %1017 = vrot.lane.b32.xlu0 %v1013, 126
    %v1018 = vpop.permute.xlu0 %1017
    %1019 = vrot.lane.b32.xlu0 %v1012, 126
    %v1020 = vpop.permute.xlu0 %1019
    %1021 = vrot.lane.b32.xlu0 %v1016, 126
    %v1022 = vpop.permute.xlu0 %1021
    %1023 = vrot.lane.b32.xlu0 %v1015, 126
    %v1024 = vpop.permute.xlu0 %1023
    %v1029 = vadd.f32 %v913, %v1018
    %v1030 = vadd.f32 %v914, %v1020
    %v1031 = vadd.f32 %v915, %v1022
    %v1032 = vadd.f32 %v916, %v1024
    %s1033 = sld [smem:[#allocation5 + $0x26]]
    %v1034 = vstv %s1033
    %v1035 = vmul.f32 %v1034, %v42
    %v1036 = vmul.f32 %v1034, %v43
    %v1037 = vmul.f32 %v1034, %v44
    %v1038 = vmul.f32 %v1034, %v45
    %v1043 = vrot.slane %v1035, 1
    %v1044 = vrot.slane %v1036, 1
    %v1045 = vsel %vm96, %v1043, %v1044
    %v1046 = vrot.slane %v1037, 1
    %v1047 = vrot.slane %v1038, 1
    %v1048 = vsel %vm96, %v1046, %v1047
    %1049 = vrot.lane.b32.xlu0 %v1045, 126
    %v1050 = vpop.permute.xlu0 %1049
    %1051 = vrot.lane.b32.xlu0 %v1044, 126
    %v1052 = vpop.permute.xlu0 %1051
    %1053 = vrot.lane.b32.xlu0 %v1048, 126
    %v1054 = vpop.permute.xlu0 %1053
    %1055 = vrot.lane.b32.xlu0 %v1047, 126
    %v1056 = vpop.permute.xlu0 %1055
    %v1061 = vadd.f32 %v939, %v1050
    %v1062 = vadd.f32 %v940, %v1052
    %v1063 = vadd.f32 %v941, %v1054
    %v1064 = vadd.f32 %v942, %v1056
    %s1065 = sld [smem:[#allocation5 + $0x36]]
    %v1066 = vstv %s1065
    %v1067 = vmul.f32 %v1066, %v42
    %v1068 = vmul.f32 %v1066, %v43
    %v1069 = vmul.f32 %v1066, %v44
    %v1070 = vmul.f32 %v1066, %v45
    %v1075 = vrot.slane %v1067, 1
    %v1076 = vrot.slane %v1068, 1
    %v1077 = vsel %vm96, %v1075, %v1076
    %v1078 = vrot.slane %v1069, 1
    %v1079 = vrot.slane %v1070, 1
    %v1080 = vsel %vm96, %v1078, %v1079
    %1081 = vrot.lane.b32.xlu0 %v1077, 126
    %v1082 = vpop.permute.xlu0 %1081
    %1083 = vrot.lane.b32.xlu0 %v1076, 126
    %v1084 = vpop.permute.xlu0 %1083
    %1085 = vrot.lane.b32.xlu0 %v1080, 126
    %v1086 = vpop.permute.xlu0 %1085
    %1087 = vrot.lane.b32.xlu0 %v1079, 126
    %v1088 = vpop.permute.xlu0 %1087
    %v1093 = vadd.f32 %v965, %v1082
    %v1094 = vadd.f32 %v966, %v1084
    %v1095 = vadd.f32 %v967, %v1086
    %v1096 = vadd.f32 %v968, %v1088
    %s1097 = sld [smem:[#allocation5 + $0xa]]
    %v1098 = vstv %s1097
    %v1099 = vmul.f32 %v1098, %v42
    %v1100 = vmul.f32 %v1098, %v43
    %v1101 = vmul.f32 %v1098, %v44
    %v1102 = vmul.f32 %v1098, %v45
    %v1107 = vrot.slane %v1099, 2
    %v1108 = vrot.slane %v1100, 2
    %v1109 = vsel %vm193, %v1107, %v1108
    %v1110 = vrot.slane %v1101, 2
    %v1111 = vrot.slane %v1102, 2
    %v1112 = vsel %vm193, %v1110, %v1111
    %1113 = vrot.lane.b32.xlu0 %v1109, 126
    %v1114 = vpop.permute.xlu0 %1113
    %1115 = vrot.lane.b32.xlu0 %v1108, 126
    %v1116 = vpop.permute.xlu0 %1115
    %1117 = vrot.lane.b32.xlu0 %v1112, 126
    %v1118 = vpop.permute.xlu0 %1117
    %1119 = vrot.lane.b32.xlu0 %v1111, 126
    %v1120 = vpop.permute.xlu0 %1119
    %v1125 = vadd.f32 %v997, %v1114
    %v1126 = vadd.f32 %v998, %v1116
    %v1127 = vadd.f32 %v999, %v1118
    %v1128 = vadd.f32 %v1000, %v1120
    %s1129 = sld [smem:[#allocation5 + $0x1a]]
    %v1130 = vstv %s1129
    %v1131 = vmul.f32 %v1130, %v42
    %v1132 = vmul.f32 %v1130, %v43
    %v1133 = vmul.f32 %v1130, %v44
    %v1134 = vmul.f32 %v1130, %v45
    %v1139 = vrot.slane %v1131, 2
    %v1140 = vrot.slane %v1132, 2
    %v1141 = vsel %vm193, %v1139, %v1140
    %v1142 = vrot.slane %v1133, 2
    %v1143 = vrot.slane %v1134, 2
    %v1144 = vsel %vm193, %v1142, %v1143
    %1145 = vrot.lane.b32.xlu0 %v1141, 126
    %v1146 = vpop.permute.xlu0 %1145
    %1147 = vrot.lane.b32.xlu0 %v1140, 126
    %v1148 = vpop.permute.xlu0 %1147
    %1149 = vrot.lane.b32.xlu0 %v1144, 126
    %v1150 = vpop.permute.xlu0 %1149
    %1151 = vrot.lane.b32.xlu0 %v1143, 126
    %v1152 = vpop.permute.xlu0 %1151
    %v1157 = vadd.f32 %v1029, %v1146
    %v1158 = vadd.f32 %v1030, %v1148
    %v1159 = vadd.f32 %v1031, %v1150
    %v1160 = vadd.f32 %v1032, %v1152
    %s1161 = sld [smem:[#allocation5 + $0x2a]]
    %v1162 = vstv %s1161
    %v1163 = vmul.f32 %v1162, %v42
    %v1164 = vmul.f32 %v1162, %v43
    %v1165 = vmul.f32 %v1162, %v44
    %v1166 = vmul.f32 %v1162, %v45
    %v1171 = vrot.slane %v1163, 2
    %v1172 = vrot.slane %v1164, 2
    %v1173 = vsel %vm193, %v1171, %v1172
    %v1174 = vrot.slane %v1165, 2
    %v1175 = vrot.slane %v1166, 2
    %v1176 = vsel %vm193, %v1174, %v1175
    %1177 = vrot.lane.b32.xlu0 %v1173, 126
    %v1178 = vpop.permute.xlu0 %1177
    %1179 = vrot.lane.b32.xlu0 %v1172, 126
    %v1180 = vpop.permute.xlu0 %1179
    %1181 = vrot.lane.b32.xlu0 %v1176, 126
    %v1182 = vpop.permute.xlu0 %1181
    %1183 = vrot.lane.b32.xlu0 %v1175, 126
    %v1184 = vpop.permute.xlu0 %1183
    %v1189 = vadd.f32 %v1061, %v1178
    %v1190 = vadd.f32 %v1062, %v1180
    %v1191 = vadd.f32 %v1063, %v1182
    %v1192 = vadd.f32 %v1064, %v1184
    %s1193 = sld [smem:[#allocation5 + $0x3a]]
    %v1194 = vstv %s1193
    %v1195 = vmul.f32 %v1194, %v42
    %v1196 = vmul.f32 %v1194, %v43
    %v1197 = vmul.f32 %v1194, %v44
    %v1198 = vmul.f32 %v1194, %v45
    %v1203 = vrot.slane %v1195, 2
    %v1204 = vrot.slane %v1196, 2
    %v1205 = vsel %vm193, %v1203, %v1204
    %v1206 = vrot.slane %v1197, 2
    %v1207 = vrot.slane %v1198, 2
    %v1208 = vsel %vm193, %v1206, %v1207
    %1209 = vrot.lane.b32.xlu0 %v1205, 126
    %v1210 = vpop.permute.xlu0 %1209
    %1211 = vrot.lane.b32.xlu0 %v1204, 126
    %v1212 = vpop.permute.xlu0 %1211
    %1213 = vrot.lane.b32.xlu0 %v1208, 126
    %v1214 = vpop.permute.xlu0 %1213
    %1215 = vrot.lane.b32.xlu0 %v1207, 126
    %v1216 = vpop.permute.xlu0 %1215
    %v1221 = vadd.f32 %v1093, %v1210
    %v1222 = vadd.f32 %v1094, %v1212
    %v1223 = vadd.f32 %v1095, %v1214
    %v1224 = vadd.f32 %v1096, %v1216
    %s1225 = sld [smem:[#allocation5 + $0xe]]
    %v1226 = vstv %s1225
    %v1227 = vmul.f32 %v1226, %v42
    %v1228 = vmul.f32 %v1226, %v43
    %v1229 = vmul.f32 %v1226, %v44
    %v1230 = vmul.f32 %v1226, %v45
    %v1235 = vrot.slane %v1227, 3
    %v1236 = vrot.slane %v1228, 3
    %v1237 = vsel %vm290, %v1235, %v1236
    %v1238 = vrot.slane %v1229, 3
    %v1239 = vrot.slane %v1230, 3
    %v1240 = vsel %vm290, %v1238, %v1239
    %1241 = vrot.lane.b32.xlu0 %v1237, 126
    %v1242 = vpop.permute.xlu0 %1241
    %1243 = vrot.lane.b32.xlu0 %v1236, 126
    %v1244 = vpop.permute.xlu0 %1243
    %1245 = vrot.lane.b32.xlu0 %v1240, 126
    %v1246 = vpop.permute.xlu0 %1245
    %1247 = vrot.lane.b32.xlu0 %v1239, 126
    %v1248 = vpop.permute.xlu0 %1247
    %v1253 = vadd.f32 %v1125, %v1242
    %v1254 = vadd.f32 %v1126, %v1244
    %v1255 = vadd.f32 %v1127, %v1246
    %v1256 = vadd.f32 %v1128, %v1248
    %s1257 = sld [smem:[#allocation5 + $0x1e]]
    %v1258 = vstv %s1257
    %v1259 = vmul.f32 %v1258, %v42
    %v1260 = vmul.f32 %v1258, %v43
    %v1261 = vmul.f32 %v1258, %v44
    %v1262 = vmul.f32 %v1258, %v45
    %v1267 = vrot.slane %v1259, 3
    %v1268 = vrot.slane %v1260, 3
    %v1269 = vsel %vm290, %v1267, %v1268
    %v1270 = vrot.slane %v1261, 3
    %v1271 = vrot.slane %v1262, 3
    %v1272 = vsel %vm290, %v1270, %v1271
    %1273 = vrot.lane.b32.xlu0 %v1269, 126
    %v1274 = vpop.permute.xlu0 %1273
    %1275 = vrot.lane.b32.xlu0 %v1268, 126
    %v1276 = vpop.permute.xlu0 %1275
    %1277 = vrot.lane.b32.xlu0 %v1272, 126
    %v1278 = vpop.permute.xlu0 %1277
    %1279 = vrot.lane.b32.xlu0 %v1271, 126
    %v1280 = vpop.permute.xlu0 %1279
    %v1285 = vadd.f32 %v1157, %v1274
    %v1286 = vadd.f32 %v1158, %v1276
    %v1287 = vadd.f32 %v1159, %v1278
    %v1288 = vadd.f32 %v1160, %v1280
    %s1289 = sld [smem:[#allocation5 + $0x2e]]
    %v1290 = vstv %s1289
    %v1291 = vmul.f32 %v1290, %v42
    %v1292 = vmul.f32 %v1290, %v43
    %v1293 = vmul.f32 %v1290, %v44
    %v1294 = vmul.f32 %v1290, %v45
    %v1299 = vrot.slane %v1291, 3
    %v1300 = vrot.slane %v1292, 3
    %v1301 = vsel %vm290, %v1299, %v1300
    %v1302 = vrot.slane %v1293, 3
    %v1303 = vrot.slane %v1294, 3
    %v1304 = vsel %vm290, %v1302, %v1303
    %1305 = vrot.lane.b32.xlu0 %v1301, 126
    %v1306 = vpop.permute.xlu0 %1305
    %1307 = vrot.lane.b32.xlu0 %v1300, 126
    %v1308 = vpop.permute.xlu0 %1307
    %1309 = vrot.lane.b32.xlu0 %v1304, 126
    %v1310 = vpop.permute.xlu0 %1309
    %1311 = vrot.lane.b32.xlu0 %v1303, 126
    %v1312 = vpop.permute.xlu0 %1311
    %v1317 = vadd.f32 %v1189, %v1306
    %v1318 = vadd.f32 %v1190, %v1308
    %v1319 = vadd.f32 %v1191, %v1310
    %v1320 = vadd.f32 %v1192, %v1312
    %s1321 = sld [smem:[#allocation5 + $0x3e]]
    %v1322 = vstv %s1321
    %v1323 = vmul.f32 %v1322, %v42
    %v1324 = vmul.f32 %v1322, %v43
    %v1325 = vmul.f32 %v1322, %v44
    %v1326 = vmul.f32 %v1322, %v45
    %v1331 = vrot.slane %v1323, 3
    %v1332 = vrot.slane %v1324, 3
    %v1333 = vsel %vm290, %v1331, %v1332
    %v1334 = vrot.slane %v1325, 3
    %v1335 = vrot.slane %v1326, 3
    %v1336 = vsel %vm290, %v1334, %v1335
    %1337 = vrot.lane.b32.xlu0 %v1333, 126
    %v1338 = vpop.permute.xlu0 %1337
    %1339 = vrot.lane.b32.xlu0 %v1332, 126
    %v1340 = vpop.permute.xlu0 %1339
    %1341 = vrot.lane.b32.xlu0 %v1336, 126
    %v1342 = vpop.permute.xlu0 %1341
    %1343 = vrot.lane.b32.xlu0 %v1335, 126
    %v1344 = vpop.permute.xlu0 %1343
    %v1349 = vadd.f32 %v1221, %v1338
    %v1350 = vadd.f32 %v1222, %v1340
    %v1351 = vadd.f32 %v1223, %v1342
    %v1352 = vadd.f32 %v1224, %v1344
    %s1353 = sld [smem:[#allocation5 + $0x3]]
    %v1354 = vstv %s1353
    %v1355 = vmul.f32 %v1354, %v42
    %v1356 = vmul.f32 %v1354, %v43
    %v1357 = vmul.f32 %v1354, %v44
    %v1358 = vmul.f32 %v1354, %v45
    %1363 = vrot.lane.b32.xlu0 %v1355, 125
    %v1364 = vpop.permute.xlu0 %1363
    %1365 = vrot.lane.b32.xlu0 %v1356, 125
    %v1366 = vpop.permute.xlu0 %1365
    %1367 = vrot.lane.b32.xlu0 %v1357, 125
    %v1368 = vpop.permute.xlu0 %1367
    %1369 = vrot.lane.b32.xlu0 %v1358, 125
    %v1370 = vpop.permute.xlu0 %1369
    %v1375 = vadd.f32 %v1253, %v1364
    %v1376 = vadd.f32 %v1254, %v1366
    %v1377 = vadd.f32 %v1255, %v1368
    %v1378 = vadd.f32 %v1256, %v1370
    %s1379 = sld [smem:[#allocation5 + $0x13]]
    %v1380 = vstv %s1379
    %v1381 = vmul.f32 %v1380, %v42
    %v1382 = vmul.f32 %v1380, %v43
    %v1383 = vmul.f32 %v1380, %v44
    %v1384 = vmul.f32 %v1380, %v45
    %1389 = vrot.lane.b32.xlu0 %v1381, 125
    %v1390 = vpop.permute.xlu0 %1389
    %1391 = vrot.lane.b32.xlu0 %v1382, 125
    %v1392 = vpop.permute.xlu0 %1391
    %1393 = vrot.lane.b32.xlu0 %v1383, 125
    %v1394 = vpop.permute.xlu0 %1393
    %1395 = vrot.lane.b32.xlu0 %v1384, 125
    %v1396 = vpop.permute.xlu0 %1395
    %v1401 = vadd.f32 %v1285, %v1390
    %v1402 = vadd.f32 %v1286, %v1392
    %v1403 = vadd.f32 %v1287, %v1394
    %v1404 = vadd.f32 %v1288, %v1396
    %s1405 = sld [smem:[#allocation5 + $0x23]]
    %v1406 = vstv %s1405
    %v1407 = vmul.f32 %v1406, %v42
    %v1408 = vmul.f32 %v1406, %v43
    %v1409 = vmul.f32 %v1406, %v44
    %v1410 = vmul.f32 %v1406, %v45
    %1415 = vrot.lane.b32.xlu0 %v1407, 125
    %v1416 = vpop.permute.xlu0 %1415
    %1417 = vrot.lane.b32.xlu0 %v1408, 125
    %v1418 = vpop.permute.xlu0 %1417
    %1419 = vrot.lane.b32.xlu0 %v1409, 125
    %v1420 = vpop.permute.xlu0 %1419
    %1421 = vrot.lane.b32.xlu0 %v1410, 125
    %v1422 = vpop.permute.xlu0 %1421
    %v1427 = vadd.f32 %v1317, %v1416
    %v1428 = vadd.f32 %v1318, %v1418
    %v1429 = vadd.f32 %v1319, %v1420
    %v1430 = vadd.f32 %v1320, %v1422
    %s1431 = sld [smem:[#allocation5 + $0x33]]
    %v1432 = vstv %s1431
    %v1433 = vmul.f32 %v1432, %v42
    %v1434 = vmul.f32 %v1432, %v43
    %v1435 = vmul.f32 %v1432, %v44
    %v1436 = vmul.f32 %v1432, %v45
    %1441 = vrot.lane.b32.xlu0 %v1433, 125
    %v1442 = vpop.permute.xlu0 %1441
    %1443 = vrot.lane.b32.xlu0 %v1434, 125
    %v1444 = vpop.permute.xlu0 %1443
    %1445 = vrot.lane.b32.xlu0 %v1435, 125
    %v1446 = vpop.permute.xlu0 %1445
    %1447 = vrot.lane.b32.xlu0 %v1436, 125
    %v1448 = vpop.permute.xlu0 %1447
    %v1453 = vadd.f32 %v1349, %v1442
    %v1454 = vadd.f32 %v1350, %v1444
    %v1455 = vadd.f32 %v1351, %v1446
    %v1456 = vadd.f32 %v1352, %v1448
    %s1457 = sld [smem:[#allocation5 + $0x7]]
    %v1458 = vstv %s1457
    %v1459 = vmul.f32 %v1458, %v42
    %v1460 = vmul.f32 %v1458, %v43
    %v1461 = vmul.f32 %v1458, %v44
    %v1462 = vmul.f32 %v1458, %v45
    %v1467 = vrot.slane %v1459, 1
    %v1468 = vrot.slane %v1460, 1
    %v1469 = vsel %vm96, %v1467, %v1468
    %v1470 = vrot.slane %v1461, 1
    %v1471 = vrot.slane %v1462, 1
    %v1472 = vsel %vm96, %v1470, %v1471
    %1473 = vrot.lane.b32.xlu0 %v1469, 125
    %v1474 = vpop.permute.xlu0 %1473
    %1475 = vrot.lane.b32.xlu0 %v1468, 125
    %v1476 = vpop.permute.xlu0 %1475
    %1477 = vrot.lane.b32.xlu0 %v1472, 125
    %v1478 = vpop.permute.xlu0 %1477
    %1479 = vrot.lane.b32.xlu0 %v1471, 125
    %v1480 = vpop.permute.xlu0 %1479
    %v1485 = vadd.f32 %v1375, %v1474
    %v1486 = vadd.f32 %v1376, %v1476
    %v1487 = vadd.f32 %v1377, %v1478
    %v1488 = vadd.f32 %v1378, %v1480
    %s1489 = sld [smem:[#allocation5 + $0x17]]
    %v1490 = vstv %s1489
    %v1491 = vmul.f32 %v1490, %v42
    %v1492 = vmul.f32 %v1490, %v43
    %v1493 = vmul.f32 %v1490, %v44
    %v1494 = vmul.f32 %v1490, %v45
    %v1499 = vrot.slane %v1491, 1
    %v1500 = vrot.slane %v1492, 1
    %v1501 = vsel %vm96, %v1499, %v1500
    %v1502 = vrot.slane %v1493, 1
    %v1503 = vrot.slane %v1494, 1
    %v1504 = vsel %vm96, %v1502, %v1503
    %1505 = vrot.lane.b32.xlu0 %v1501, 125
    %v1506 = vpop.permute.xlu0 %1505
    %1507 = vrot.lane.b32.xlu0 %v1500, 125
    %v1508 = vpop.permute.xlu0 %1507
    %1509 = vrot.lane.b32.xlu0 %v1504, 125
    %v1510 = vpop.permute.xlu0 %1509
    %1511 = vrot.lane.b32.xlu0 %v1503, 125
    %v1512 = vpop.permute.xlu0 %1511
    %v1517 = vadd.f32 %v1401, %v1506
    %v1518 = vadd.f32 %v1402, %v1508
    %v1519 = vadd.f32 %v1403, %v1510
    %v1520 = vadd.f32 %v1404, %v1512
    %s1521 = sld [smem:[#allocation5 + $0x27]]
    %v1522 = vstv %s1521
    %v1523 = vmul.f32 %v1522, %v42
    %v1524 = vmul.f32 %v1522, %v43
    %v1525 = vmul.f32 %v1522, %v44
    %v1526 = vmul.f32 %v1522, %v45
    %v1531 = vrot.slane %v1523, 1
    %v1532 = vrot.slane %v1524, 1
    %v1533 = vsel %vm96, %v1531, %v1532
    %v1534 = vrot.slane %v1525, 1
    %v1535 = vrot.slane %v1526, 1
    %v1536 = vsel %vm96, %v1534, %v1535
    %1537 = vrot.lane.b32.xlu0 %v1533, 125
    %v1538 = vpop.permute.xlu0 %1537
    %1539 = vrot.lane.b32.xlu0 %v1532, 125
    %v1540 = vpop.permute.xlu0 %1539
    %1541 = vrot.lane.b32.xlu0 %v1536, 125
    %v1542 = vpop.permute.xlu0 %1541
    %1543 = vrot.lane.b32.xlu0 %v1535, 125
    %v1544 = vpop.permute.xlu0 %1543
    %v1549 = vadd.f32 %v1427, %v1538
    %v1550 = vadd.f32 %v1428, %v1540
    %v1551 = vadd.f32 %v1429, %v1542
    %v1552 = vadd.f32 %v1430, %v1544
    %s1553 = sld [smem:[#allocation5 + $0x37]]
    %v1554 = vstv %s1553
    %v1555 = vmul.f32 %v1554, %v42
    %v1556 = vmul.f32 %v1554, %v43
    %v1557 = vmul.f32 %v1554, %v44
    %v1558 = vmul.f32 %v1554, %v45
    %v1563 = vrot.slane %v1555, 1
    %v1564 = vrot.slane %v1556, 1
    %v1565 = vsel %vm96, %v1563, %v1564
    %v1566 = vrot.slane %v1557, 1
    %v1567 = vrot.slane %v1558, 1
    %v1568 = vsel %vm96, %v1566, %v1567
    %1569 = vrot.lane.b32.xlu0 %v1565, 125
    %v1570 = vpop.permute.xlu0 %1569
    %1571 = vrot.lane.b32.xlu0 %v1564, 125
    %v1572 = vpop.permute.xlu0 %1571
    %1573 = vrot.lane.b32.xlu0 %v1568, 125
    %v1574 = vpop.permute.xlu0 %1573
    %1575 = vrot.lane.b32.xlu0 %v1567, 125
    %v1576 = vpop.permute.xlu0 %1575
    %v1581 = vadd.f32 %v1453, %v1570
    %v1582 = vadd.f32 %v1454, %v1572
    %v1583 = vadd.f32 %v1455, %v1574
    %v1584 = vadd.f32 %v1456, %v1576
    %s1585 = sld [smem:[#allocation5 + $0xb]]
    %v1586 = vstv %s1585
    %v1587 = vmul.f32 %v1586, %v42
    %v1588 = vmul.f32 %v1586, %v43
    %v1589 = vmul.f32 %v1586, %v44
    %v1590 = vmul.f32 %v1586, %v45
    %v1595 = vrot.slane %v1587, 2
    %v1596 = vrot.slane %v1588, 2
    %v1597 = vsel %vm193, %v1595, %v1596
    %v1598 = vrot.slane %v1589, 2
    %v1599 = vrot.slane %v1590, 2
    %v1600 = vsel %vm193, %v1598, %v1599
    %1601 = vrot.lane.b32.xlu0 %v1597, 125
    %v1602 = vpop.permute.xlu0 %1601
    %1603 = vrot.lane.b32.xlu0 %v1596, 125
    %v1604 = vpop.permute.xlu0 %1603
    %1605 = vrot.lane.b32.xlu0 %v1600, 125
    %v1606 = vpop.permute.xlu0 %1605
    %1607 = vrot.lane.b32.xlu0 %v1599, 125
    %v1608 = vpop.permute.xlu0 %1607
    %v1613 = vadd.f32 %v1485, %v1602
    %v1614 = vadd.f32 %v1486, %v1604
    %v1615 = vadd.f32 %v1487, %v1606
    %v1616 = vadd.f32 %v1488, %v1608
    %s1617 = sld [smem:[#allocation5 + $0x1b]]
    %v1618 = vstv %s1617
    %v1619 = vmul.f32 %v1618, %v42
    %v1620 = vmul.f32 %v1618, %v43
    %v1621 = vmul.f32 %v1618, %v44
    %v1622 = vmul.f32 %v1618, %v45
    %v1627 = vrot.slane %v1619, 2
    %v1628 = vrot.slane %v1620, 2
    %v1629 = vsel %vm193, %v1627, %v1628
    %v1630 = vrot.slane %v1621, 2
    %v1631 = vrot.slane %v1622, 2
    %v1632 = vsel %vm193, %v1630, %v1631
    %1633 = vrot.lane.b32.xlu0 %v1629, 125
    %v1634 = vpop.permute.xlu0 %1633
    %1635 = vrot.lane.b32.xlu0 %v1628, 125
    %v1636 = vpop.permute.xlu0 %1635
    %1637 = vrot.lane.b32.xlu0 %v1632, 125
    %v1638 = vpop.permute.xlu0 %1637
    %1639 = vrot.lane.b32.xlu0 %v1631, 125
    %v1640 = vpop.permute.xlu0 %1639
    %v1645 = vadd.f32 %v1517, %v1634
    %v1646 = vadd.f32 %v1518, %v1636
    %v1647 = vadd.f32 %v1519, %v1638
    %v1648 = vadd.f32 %v1520, %v1640
    %s1649 = sld [smem:[#allocation5 + $0x2b]]
    %v1650 = vstv %s1649
    %v1651 = vmul.f32 %v1650, %v42
    %v1652 = vmul.f32 %v1650, %v43
    %v1653 = vmul.f32 %v1650, %v44
    %v1654 = vmul.f32 %v1650, %v45
    %v1659 = vrot.slane %v1651, 2
    %v1660 = vrot.slane %v1652, 2
    %v1661 = vsel %vm193, %v1659, %v1660
    %v1662 = vrot.slane %v1653, 2
    %v1663 = vrot.slane %v1654, 2
    %v1664 = vsel %vm193, %v1662, %v1663
    %1665 = vrot.lane.b32.xlu0 %v1661, 125
    %v1666 = vpop.permute.xlu0 %1665
    %1667 = vrot.lane.b32.xlu0 %v1660, 125
    %v1668 = vpop.permute.xlu0 %1667
    %1669 = vrot.lane.b32.xlu0 %v1664, 125
    %v1670 = vpop.permute.xlu0 %1669
    %1671 = vrot.lane.b32.xlu0 %v1663, 125
    %v1672 = vpop.permute.xlu0 %1671
    %v1677 = vadd.f32 %v1549, %v1666
    %v1678 = vadd.f32 %v1550, %v1668
    %v1679 = vadd.f32 %v1551, %v1670
    %v1680 = vadd.f32 %v1552, %v1672
    %s1681 = sld [smem:[#allocation5 + $0x3b]]
    %v1682 = vstv %s1681
    %v1683 = vmul.f32 %v1682, %v42
    %v1684 = vmul.f32 %v1682, %v43
    %v1685 = vmul.f32 %v1682, %v44
    %v1686 = vmul.f32 %v1682, %v45
    %v1691 = vrot.slane %v1683, 2
    %v1692 = vrot.slane %v1684, 2
    %v1693 = vsel %vm193, %v1691, %v1692
    %v1694 = vrot.slane %v1685, 2
    %v1695 = vrot.slane %v1686, 2
    %v1696 = vsel %vm193, %v1694, %v1695
    %1697 = vrot.lane.b32.xlu0 %v1693, 125
    %v1698 = vpop.permute.xlu0 %1697
    %1699 = vrot.lane.b32.xlu0 %v1692, 125
    %v1700 = vpop.permute.xlu0 %1699
    %1701 = vrot.lane.b32.xlu0 %v1696, 125
    %v1702 = vpop.permute.xlu0 %1701
    %1703 = vrot.lane.b32.xlu0 %v1695, 125
    %v1704 = vpop.permute.xlu0 %1703
    %v1709 = vadd.f32 %v1581, %v1698
    %v1710 = vadd.f32 %v1582, %v1700
    %v1711 = vadd.f32 %v1583, %v1702
    %v1712 = vadd.f32 %v1584, %v1704
    %s1713 = sld [smem:[#allocation5 + $0xf]]
    %v1714 = vstv %s1713
    %v1715 = vmul.f32 %v1714, %v42
    %v1716 = vmul.f32 %v1714, %v43
    %v1717 = vmul.f32 %v1714, %v44
    %v1718 = vmul.f32 %v1714, %v45
    %v1723 = vrot.slane %v1715, 3
    %v1724 = vrot.slane %v1716, 3
    %v1725 = vsel %vm290, %v1723, %v1724
    %v1726 = vrot.slane %v1717, 3
    %v1727 = vrot.slane %v1718, 3
    %v1728 = vsel %vm290, %v1726, %v1727
    %1729 = vrot.lane.b32.xlu0 %v1725, 125
    %v1730 = vpop.permute.xlu0 %1729
    %1731 = vrot.lane.b32.xlu0 %v1724, 125
    %v1732 = vpop.permute.xlu0 %1731
    %1733 = vrot.lane.b32.xlu0 %v1728, 125
    %v1734 = vpop.permute.xlu0 %1733
    %1735 = vrot.lane.b32.xlu0 %v1727, 125
    %v1736 = vpop.permute.xlu0 %1735
    %v1741 = vadd.f32 %v1613, %v1730
    %v1742 = vadd.f32 %v1614, %v1732
    %v1743 = vadd.f32 %v1615, %v1734
    %v1744 = vadd.f32 %v1616, %v1736
    %s1745 = sld [smem:[#allocation5 + $0x1f]]
    %v1746 = vstv %s1745
    %v1747 = vmul.f32 %v1746, %v42
    %v1748 = vmul.f32 %v1746, %v43
    %v1749 = vmul.f32 %v1746, %v44
    %v1750 = vmul.f32 %v1746, %v45
    %v1755 = vrot.slane %v1747, 3
    %v1756 = vrot.slane %v1748, 3
    %v1757 = vsel %vm290, %v1755, %v1756
    %v1758 = vrot.slane %v1749, 3
    %v1759 = vrot.slane %v1750, 3
    %v1760 = vsel %vm290, %v1758, %v1759
    %1761 = vrot.lane.b32.xlu0 %v1757, 125
    %v1762 = vpop.permute.xlu0 %1761
    %1763 = vrot.lane.b32.xlu0 %v1756, 125
    %v1764 = vpop.permute.xlu0 %1763
    %1765 = vrot.lane.b32.xlu0 %v1760, 125
    %v1766 = vpop.permute.xlu0 %1765
    %1767 = vrot.lane.b32.xlu0 %v1759, 125
    %v1768 = vpop.permute.xlu0 %1767
    %v1773 = vadd.f32 %v1645, %v1762
    %v1774 = vadd.f32 %v1646, %v1764
    %v1775 = vadd.f32 %v1647, %v1766
    %v1776 = vadd.f32 %v1648, %v1768
    %s1777 = sld [smem:[#allocation5 + $0x2f]]
    %v1778 = vstv %s1777
    %v1779 = vmul.f32 %v1778, %v42
    %v1780 = vmul.f32 %v1778, %v43
    %v1781 = vmul.f32 %v1778, %v44
    %v1782 = vmul.f32 %v1778, %v45
    %v1787 = vrot.slane %v1779, 3
    %v1788 = vrot.slane %v1780, 3
    %v1789 = vsel %vm290, %v1787, %v1788
    %v1790 = vrot.slane %v1781, 3
    %v1791 = vrot.slane %v1782, 3
    %v1792 = vsel %vm290, %v1790, %v1791
    %1793 = vrot.lane.b32.xlu0 %v1789, 125
    %v1794 = vpop.permute.xlu0 %1793
    %1795 = vrot.lane.b32.xlu0 %v1788, 125
    %v1796 = vpop.permute.xlu0 %1795
    %1797 = vrot.lane.b32.xlu0 %v1792, 125
    %v1798 = vpop.permute.xlu0 %1797
    %1799 = vrot.lane.b32.xlu0 %v1791, 125
    %v1800 = vpop.permute.xlu0 %1799
    %v1805 = vadd.f32 %v1677, %v1794
    %v1806 = vadd.f32 %v1678, %v1796
    %v1807 = vadd.f32 %v1679, %v1798
    %v1808 = vadd.f32 %v1680, %v1800
    %s1809 = sld [smem:[#allocation5 + $0x3f]]
    %v1810 = vstv %s1809
    %v1811 = vmul.f32 %v1810, %v42
    %v1812 = vmul.f32 %v1810, %v43
    %v1813 = vmul.f32 %v1810, %v44
    %v1814 = vmul.f32 %v1810, %v45
    %v1819 = vrot.slane %v1811, 3
    %v1820 = vrot.slane %v1812, 3
    %v1821 = vsel %vm290, %v1819, %v1820
    %v1822 = vrot.slane %v1813, 3
    %v1823 = vrot.slane %v1814, 3
    %v1824 = vsel %vm290, %v1822, %v1823
    %1825 = vrot.lane.b32.xlu0 %v1821, 125
    %v1826 = vpop.permute.xlu0 %1825
    %1827 = vrot.lane.b32.xlu0 %v1820, 125
    %v1828 = vpop.permute.xlu0 %1827
    %1829 = vrot.lane.b32.xlu0 %v1824, 125
    %v1830 = vpop.permute.xlu0 %1829
    %1831 = vrot.lane.b32.xlu0 %v1823, 125
    %v1832 = vpop.permute.xlu0 %1831
    %v1837 = vadd.f32 %v1709, %v1826
    %v1838 = vadd.f32 %v1710, %v1828
    %v1839 = vadd.f32 %v1711, %v1830
    %v1840 = vadd.f32 %v1712, %v1832
    %vm1841 = vcmask 105472
    %1842 = vst.msk [vmem:[%s2] sm:$0xff] %vm1841, %v1741
    %vm1843 = vcmask 102400
    %1844 = vst.msk [vmem:[%s2 + $0x8] sm:$0x1f] %vm1843, %v1742
    %1845 = vst.msk [vmem:[%s2 + $0x40] sm:$0xff] %vm1841, %v1743
    %1846 = vst.msk [vmem:[%s2 + $0x48] sm:$0x1f] %vm1843, %v1744
    %v1847 = vmax.f32 %v1741, 0.0
    %v1848 = vmax.f32 %v1742, 0.0
    %v1849 = vmax.f32 %v1743, 0.0
    %v1850 = vmax.f32 %v1744, 0.0
    %1851 = vst.msk [vmem:[%s3] sm:$0xff] %vm1841, %v1847
    %1852 = vst.msk [vmem:[%s3 + $0x8] sm:$0x1f] %vm1843, %v1848
    %1853 = vst.msk [vmem:[%s3 + $0x40] sm:$0xff] %vm1841, %v1849
    %1854 = vst.msk [vmem:[%s3 + $0x48] sm:$0x1f] %vm1843, %v1850
    %s1855 = scalar_lea.vmem %s2, 16
    %1856 = vst.msk [vmem:[%s1855] sm:$0xff] %vm1841, %v1773
    %1857 = vst.msk [vmem:[%s1855 + $0x8] sm:$0x1f] %vm1843, %v1774
    %1858 = vst.msk [vmem:[%s1855 + $0x40] sm:$0xff] %vm1841, %v1775
    %1859 = vst.msk [vmem:[%s1855 + $0x48] sm:$0x1f] %vm1843, %v1776
    %v1860 = vmax.f32 %v1773, 0.0
    %v1861 = vmax.f32 %v1774, 0.0
    %v1862 = vmax.f32 %v1775, 0.0
    %v1863 = vmax.f32 %v1776, 0.0
    %s1864 = scalar_lea.vmem %s3, 16
    %1865 = vst.msk [vmem:[%s1864] sm:$0xff] %vm1841, %v1860
    %1866 = vst.msk [vmem:[%s1864 + $0x8] sm:$0x1f] %vm1843, %v1861
    %1867 = vst.msk [vmem:[%s1864 + $0x40] sm:$0xff] %vm1841, %v1862
    %1868 = vst.msk [vmem:[%s1864 + $0x48] sm:$0x1f] %vm1843, %v1863
    %s1869 = scalar_lea.vmem %s2, 32
    %1870 = vst.msk [vmem:[%s1869] sm:$0xff] %vm1841, %v1805
    %1871 = vst.msk [vmem:[%s1869 + $0x8] sm:$0x1f] %vm1843, %v1806
    %1872 = vst.msk [vmem:[%s1869 + $0x40] sm:$0xff] %vm1841, %v1807
    %1873 = vst.msk [vmem:[%s1869 + $0x48] sm:$0x1f] %vm1843, %v1808
    %v1874 = vmax.f32 %v1805, 0.0
    %v1875 = vmax.f32 %v1806, 0.0
    %v1876 = vmax.f32 %v1807, 0.0
    %v1877 = vmax.f32 %v1808, 0.0
    %s1878 = scalar_lea.vmem %s3, 32
    %1879 = vst.msk [vmem:[%s1878] sm:$0xff] %vm1841, %v1874
    %1880 = vst.msk [vmem:[%s1878 + $0x8] sm:$0x1f] %vm1843, %v1875
    %1881 = vst.msk [vmem:[%s1878 + $0x40] sm:$0xff] %vm1841, %v1876
    %1882 = vst.msk [vmem:[%s1878 + $0x48] sm:$0x1f] %vm1843, %v1877
    %s1883 = scalar_lea.vmem %s2, 48
    %1884 = vst.msk [vmem:[%s1883] sm:$0xff] %vm1841, %v1837
    %1885 = vst.msk [vmem:[%s1883 + $0x8] sm:$0x1f] %vm1843, %v1838
    %1886 = vst.msk [vmem:[%s1883 + $0x40] sm:$0xff] %vm1841, %v1839
    %1887 = vst.msk [vmem:[%s1883 + $0x48] sm:$0x1f] %vm1843, %v1840
    %v1888 = vmax.f32 %v1837, 0.0
    %v1889 = vmax.f32 %v1838, 0.0
    %v1890 = vmax.f32 %v1839, 0.0
    %v1891 = vmax.f32 %v1840, 0.0
    %s1892 = scalar_lea.vmem %s3, 48
    %1893 = vst.msk [vmem:[%s1892] sm:$0xff] %vm1841, %v1888
    %1894 = vst.msk [vmem:[%s1892 + $0x8] sm:$0x1f] %vm1843, %v1889
    %1895 = vst.msk [vmem:[%s1892 + $0x40] sm:$0xff] %vm1841, %v1890
    %1896 = vst.msk [vmem:[%s1892 + $0x48] sm:$0x1f] %vm1843, %v1891
    // Predicated region
    $region18: #{tpu_custom_call.1} parent=1 // pred_check
      _
    $region19: #{tpu_custom_call.1} parent=1 // pred_check_branch
      %1898 = sbr.rel (0) target = $region21
    $region20: #{tpu_custom_call.1} parent=1 // pred_region
      _
    $region21: #{tpu_custom_call.1} parent=1 // pred_fallthru
      _
    // Predicated region
    $region22: #{tpu_custom_call.1} parent=1 // pred_check
      _
    $region23: #{tpu_custom_call.1} parent=1 // pred_check_branch
      %1900 = sbr.rel (0) target = $region25
    $region24: #{tpu_custom_call.1} parent=1 // pred_region
      _
    $region25: #{tpu_custom_call.1} parent=1 // pred_fallthru
      _
    // Predicated region
    $region26: #{tpu_custom_call.1} parent=1 // pred_check
      _
    $region27: #{tpu_custom_call.1} parent=1 // pred_check_branch
      %1902 = sbr.rel (0) target = $region29
    $region28: #{tpu_custom_call.1} parent=1 // pred_region
      _
    $region29: #{tpu_custom_call.1} parent=1 // pred_fallthru
      _
    // Predicated region
    $region30: #{tpu_custom_call.1} parent=1 // pred_check
      _
    $region31: #{tpu_custom_call.1} parent=1 // pred_check_branch
      %1904 = sbr.rel (0) target = $region33
    $region32: #{tpu_custom_call.1} parent=1 // pred_region
      _
    $region33: #{tpu_custom_call.1} parent=1 // pred_fallthru
      _
    %1905 = vsyncpa [#allocation3], 1
    %1906 = vsyncpa [#allocation4], 1

</llo_original>
